<compile_context>
chip_gen: v6e
topology: v6e:2x2x1
jax: 0.10.0
libtpu: 0.0.40
codegen_flags: <defaults>
</compile_context>

<pallas_src>
import math

import jax
import jax.numpy as jnp
from jax.experimental import pallas as pl
from jax.experimental.pallas import tpu as pltpu


# --------------------------------------------------------------------------
# Kernel: one grid step = one group of G windows, all layers as wide
# block-diagonal matmuls.  No inner loop, no concatenates.
# --------------------------------------------------------------------------
def _cvae_group_kernel(x_ref, c_ref, e_ref,
                       avg_ref, var_ref, ivar_ref,
                       w1x_ref, w1c_ref, b1_ref,
                       w2mu_ref, b21_ref, w2lv_ref, b22_ref,
                       w3z_ref, w3c_ref, b3_ref,
                       w4_ref, b4_ref,
                       dec_ref, xn_ref, raw_ref, mu_ref, lv_ref):
    x = x_ref[0]          # (bs_pad, G*W)
    c = c_ref[0]          # (bs_pad, G*C)
    eps = e_ref[0]        # (bs_pad, G*E)
    avg = avg_ref[0]      # (1, G*W)
    var = var_ref[0]      # (1, G*W)
    ivar = ivar_ref[0]    # (1, G*W)

    # residual normalization: (x - avg) * (1/var)
    xn = (x - avg) * ivar

    # encode: h1 = relu(fc1([x, c]))  (block-diag over the G windows)
    h1 = jnp.maximum(
        jnp.dot(xn, w1x_ref[0], preferred_element_type=jnp.float32)
        + jnp.dot(c, w1c_ref[0], preferred_element_type=jnp.float32)
        + b1_ref[0], 0.0)

    # fc21 / fc22
    mu = jnp.dot(h1, w2mu_ref[0], preferred_element_type=jnp.float32) + b21_ref[0]
    logvar = jnp.dot(h1, w2lv_ref[0], preferred_element_type=jnp.float32) + b22_ref[0]

    # reparametrize (training mode)
    z = eps * jnp.exp(0.5 * logvar) + mu

    # decode: fc4(relu(fc3([z, c])))
    h3 = jnp.maximum(
        jnp.dot(z, w3z_ref[0], preferred_element_type=jnp.float32)
        + jnp.dot(c, w3c_ref[0], preferred_element_type=jnp.float32)
        + b3_ref[0], 0.0)
    dec = jnp.dot(h3, w4_ref[0], preferred_element_type=jnp.float32) + b4_ref[0]

    # residual de-normalization + direct lane-dense stores
    dec_ref[0] = (dec + avg) * var
    xn_ref[0] = xn
    raw_ref[0] = dec
    mu_ref[0] = mu
    lv_ref[0] = logvar


# --------------------------------------------------------------------------
# Group-size selection: lane-dense main outputs first, then >=2 grid steps
# (pipelining / v7x megacore), then lane-dense mu/logvar, then largest G that
# keeps the block-diagonal per-group weights within a VMEM budget.
# --------------------------------------------------------------------------
def _pick_group_size(nw, W, C, H, E, weight_budget_bytes=6 << 20):
    per_window = H * (W + C) + 2 * H * E + H * (E + C) + H * W    # f32 elems

    def wbytes(G):
        return 4 * G * G * per_window        # block-diag weights for one group

    cands = [d for d in range(1, nw + 1)
             if nw % d == 0 and wbytes(d) <= weight_budget_bytes]
    if not cands:
        cands = [1]

    def score(G):
        return ((G * W) % 128 == 0,          # dec / xn / raw lane-dense
                (nw // G) >= 2,              # pipelining + megacore
                (G * E) % 128 == 0,          # mu / logvar lane-dense
                G)                           # fewer, fatter steps
    return max(cands, key=score)


# --------------------------------------------------------------------------
# Wrapper
# --------------------------------------------------------------------------
def cvaelai_forward(x, c, eps, params):
    """
    x   : (bs, D)      float32
    c   : (bs, nw, C)  float32
    eps : (bs, nw, E)  float32  (training-mode reparametrization noise)
    Returns (output_decoder, output_mu, output_logvar, (x_norm, dec_raw)),
    matching CVAELAI.forward (is_residual=True, residual_var provided).
    """
    bs, D = x.shape
    nw = params["w1"].shape[0]
    W = params["w4"].shape[-1]
    H = params["w1"].shape[-1]
    E = params["w21"].shape[-1]
    C = c.shape[-1]
    assert D == nw * W, "input_dimension must be a multiple of window_size"

    G = _pick_group_size(nw, W, C, H, E)
    ngrp = nw // G
    bs_pad = max(8, ((bs + 7) // 8) * 8)                 # sublane-align batch

    # ---- wrapper-side layout plumbing (one-time, outside the hot kernel) ----
    def bd(w):
        # (nw, A, B) -> (ngrp, G*A, G*B) block-diagonal per group
        A, B = w.shape[1], w.shape[2]
        wg = w.reshape(ngrp, G, A, B)
        eye = jnp.eye(G, dtype=w.dtype)
        return jnp.einsum('igab,gh->igahb', wg, eye).reshape(ngrp, G * A, G * B)

    def cat(v):
        # (nw, 1, B) -> (ngrp, 1, G*B) lane-concatenated per group
        return v.reshape(ngrp, 1, G * v.shape[-1])

    w1x_bd = bd(params["w1"][:, :W, :])                  # (ngrp, G*W, G*H)
    w1c_bd = bd(params["w1"][:, W:, :])                  # (ngrp, G*C, G*H)
    w2mu_bd = bd(params["w21"])                          # (ngrp, G*H, G*E)
    w2lv_bd = bd(params["w22"])                          # (ngrp, G*H, G*E)
    w3z_bd = bd(params["w3"][:, :E, :])                  # (ngrp, G*E, G*H)
    w3c_bd = bd(params["w3"][:, E:, :])                  # (ngrp, G*C, G*H)
    w4_bd = bd(params["w4"])                             # (ngrp, G*H, G*W)
    b1_c = cat(params["b1"])
    b21_c = cat(params["b21"])
    b22_c = cat(params["b22"])
    b3_c = cat(params["b3"])
    b4_c = cat(params["b4"])
    avg_c = cat(params["avg"])                           # (ngrp, 1, G*W)
    var_c = cat(params["var"])
    ivar_c = 1.0 / var_c                                 # divide -> multiply

    x_p = jnp.pad(x, ((0, bs_pad - bs), (0, 0)))
    c_p = jnp.pad(c, ((0, bs_pad - bs), (0, 0), (0, 0)))
    e_p = jnp.pad(eps, ((0, bs_pad - bs), (0, 0), (0, 0)))
    x_g = x_p.reshape(bs_pad, ngrp, G * W).transpose(1, 0, 2)   # (ngrp, bs_pad, G*W)
    c_g = c_p.reshape(bs_pad, ngrp, G * C).transpose(1, 0, 2)   # (ngrp, bs_pad, G*C)
    e_g = e_p.reshape(bs_pad, ngrp, G * E).transpose(1, 0, 2)   # (ngrp, bs_pad, G*E)

    inputs = [x_g, c_g, e_g, avg_c, var_c, ivar_c,
              w1x_bd, w1c_bd, b1_c, w2mu_bd, b21_c, w2lv_bd, b22_c,
              w3z_bd, w3c_bd, b3_c, w4_bd, b4_c]

    # All inputs are blocked along the group axis: only ~2 groups of weights
    # live in VMEM at any time, and the pipeline prefetches group i+1.
    in_specs = [pl.BlockSpec((1,) + a.shape[1:], lambda i: (i, 0, 0))
                for a in inputs]

    out_shapes = (
        jax.ShapeDtypeStruct((ngrp, bs_pad, G * W), jnp.float32),   # dec_final
        jax.ShapeDtypeStruct((ngrp, bs_pad, G * W), jnp.float32),   # x_norm
        jax.ShapeDtypeStruct((ngrp, bs_pad, G * W), jnp.float32),   # dec_raw
        jax.ShapeDtypeStruct((ngrp, bs_pad, G * E), jnp.float32),   # mu
        jax.ShapeDtypeStruct((ngrp, bs_pad, G * E), jnp.float32),   # logvar
    )
    out_specs = (
        [pl.BlockSpec((1, bs_pad, G * W), lambda i: (i, 0, 0))] * 3
        + [pl.BlockSpec((1, bs_pad, G * E), lambda i: (i, 0, 0))] * 2
    )

    # Advisory cost so XLA overlaps the surrounding layout ops with the kernel.
    flops = 2 * bs_pad * ngrp * (
        (G * W) * (G * H) + 2 * (G * C) * (G * H) + 3 * (G * H) * (G * E)
        + (G * H) * (G * W))
    bytes_accessed = 4 * (sum(int(a.size) for a in inputs)
                          + sum(int(math.prod(s.shape)) for s in out_shapes))
    cost = pl.CostEstimate(flops=int(flops),
                           transcendentals=int(bs_pad * nw * E),
                           bytes_accessed=int(bytes_accessed))

    dec_p, xn_p, raw_p, mu_p, lv_p = pl.pallas_call(
        _cvae_group_kernel,
        out_shape=out_shapes,
        grid_spec=pltpu.PrefetchScalarGridSpec(
            num_scalar_prefetch=0,
            grid=(ngrp,),
            in_specs=in_specs,
            out_specs=out_specs,
        ),
        compiler_params=pltpu.CompilerParams(
            dimension_semantics=("parallel",),     # independent groups -> megacore
            vmem_limit_bytes=64 * 1024 * 1024,     # usage bounded by weight budget
        ),
        cost_estimate=cost,
    )(*inputs)

    # ---- unpack back to the PyTorch output conventions ----
    dec_final = dec_p[:, :bs].transpose(1, 0, 2).reshape(bs, D)
    x_norm = xn_p[:, :bs].transpose(1, 0, 2).reshape(bs, D)
    dec_raw = raw_p[:, :bs].transpose(1, 0, 2).reshape(bs, D)
    out_mu = (mu_p[:, :bs].reshape(ngrp, bs, G, E)
              .transpose(1, 3, 0, 2).reshape(bs, E, nw))
    out_logvar = (lv_p[:, :bs].reshape(ngrp, bs, G, E)
                  .transpose(1, 3, 0, 2).reshape(bs, E, nw))

    return dec_final, out_mu, out_logvar, (x_norm, dec_raw)


# --------------------------------------------------------------------------
# Parameter init (PyTorch-Linear-style uniform, stacked per window)
# --------------------------------------------------------------------------
def init_params(key, num_windows, window_size, class_size, hidden_size,
                embedding_size):
    def linear(k, fan_in, fan_out):
        kw, kb = jax.random.split(k)
        bound = 1.0 / math.sqrt(fan_in)
        w = jax.random.uniform(kw, (num_windows, fan_in, fan_out),
                               jnp.float32, -bound, bound)
        b = jax.random.uniform(kb, (num_windows, 1, fan_out),
                               jnp.float32, -bound, bound)
        return w, b

    ks = jax.random.split(key, 7)
    W, C, H, E = window_size, class_size, hidden_size, embedding_size
    w1, b1 = linear(ks[0], W + C, H)
    w21, b21 = linear(ks[1], H, E)
    w22, b22 = linear(ks[2], H, E)
    w3, b3 = linear(ks[3], E + C, H)
    w4, b4 = linear(ks[4], H, W)
    avg = 0.1 * jax.random.normal(ks[5], (num_windows, 1, W), jnp.float32)
    var = 1.0 + 0.1 * jax.random.uniform(ks[6], (num_windows, 1, W), jnp.float32)
    return dict(w1=w1, b1=b1, w21=w21, b21=b21, w22=w22, b22=b22,
                w3=w3, b3=b3, w4=w4, b4=b4, avg=avg, var=var)


# --------------------------------------------------------------------------
# Pure-JAX reference (per-window loop) for verification
# --------------------------------------------------------------------------
def _reference_forward(x, c, eps, params):
    bs, D = x.shape
    nw = params["w1"].shape[0]
    W = params["w4"].shape[-1]
    E = params["w21"].shape[-1]
    decs, dec_raws, mus, logvars, xns = [], [], [], [], []
    for j in range(nw):
        xj = x[:, j * W:(j + 1) * W]
        cj = c[:, j, :]
        avg, var = params["avg"][j], params["var"][j]
        xn = (xj - avg) / var
        inp = jnp.concatenate([xn, cj], axis=1)
        h1 = jax.nn.relu(inp @ params["w1"][j] + params["b1"][j])
        mu = h1 @ params["w21"][j] + params["b21"][j]
        logvar = h1 @ params["w22"][j] + params["b22"][j]
        z = eps[:, j, :] * jnp.exp(0.5 * logvar) + mu
        inp2 = jnp.concatenate([z, cj], axis=1)
        h3 = jax.nn.relu(inp2 @ params["w3"][j] + params["b3"][j])
        dec = h3 @ params["w4"][j] + params["b4"][j]
        decs.append((dec + avg) * var)
        dec_raws.append(dec)
        mus.append(mu)
        logvars.append(logvar)
        xns.append(xn)
    out_dec = jnp.concatenate(decs, axis=1)
    out_mu = jnp.stack(mus, axis=2)
    out_logvar = jnp.stack(logvars, axis=2)
    return out_dec, out_mu, out_logvar, (jnp.concatenate(xns, axis=1),
                                         jnp.concatenate(dec_raws, axis=1))


if __name__ == "__main__":
    # Small config consistent with the module.
    batch = 4
    window_size = 16
    input_dimension = 256     # -> num_windows = 16 (G=8, ngrp=2: lane-dense + megacore)
    class_size = 3
    hidden_size = 32
    embedding_size = 8
    num_windows = input_dimension // window_size

    key = jax.random.PRNGKey(0)
    kx, kc, keps, kp = jax.random.split(key, 4)

    x = jax.random.normal(kx, (batch, input_dimension), jnp.float32)
    anc = jax.random.randint(kc, (batch, num_windows), 0, class_size)
    c = jax.nn.one_hot(anc, class_size, dtype=jnp.float32)     # (bs, nw, C)
    eps = jax.random.normal(keps, (batch, num_windows, embedding_size),
                            jnp.float32)

    params = init_params(kp, num_windows, window_size, class_size,
                         hidden_size, embedding_size)

    out_dec, out_mu, out_logvar, (x_norm, dec_raw) = jax.block_until_ready(
        cvaelai_forward(x, c, eps, params))

    # verify against pure-JAX reference
    r_dec, r_mu, r_logvar, (r_xn, r_raw) = _reference_forward(x, c, eps, params)
    assert out_dec.shape == (batch, input_dimension)
    assert out_mu.shape == (batch, embedding_size, num_windows)
    assert out_logvar.shape == (batch, embedding_size, num_windows)
    for a, b in [(out_dec, r_dec), (out_mu, r_mu), (out_logvar, r_logvar),
                 (x_norm, r_xn), (dec_raw, r_raw)]:
        assert jnp.allclose(a, b, atol=1e-5, rtol=1e-5), "mismatch vs reference"

    print("KERNEL_OK")
</pallas_src>

<mosaic_0001>
module attributes {stable_mosaic.version = 11 : i64} {
  func.func @_cvae_group_kernel(%arg0: i32, %arg1: memref<1x8x128xf32, #tpu.memory_space<vmem>>, %arg2: memref<1x8x24xf32, #tpu.memory_space<vmem>>, %arg3: memref<1x8x64xf32, #tpu.memory_space<vmem>>, %arg4: memref<1x1x128xf32, #tpu.memory_space<vmem>>, %arg5: memref<1x1x128xf32, #tpu.memory_space<vmem>>, %arg6: memref<1x1x128xf32, #tpu.memory_space<vmem>>, %arg7: memref<1x128x256xf32, #tpu.memory_space<vmem>>, %arg8: memref<1x24x256xf32, #tpu.memory_space<vmem>>, %arg9: memref<1x1x256xf32, #tpu.memory_space<vmem>>, %arg10: memref<1x256x64xf32, #tpu.memory_space<vmem>>, %arg11: memref<1x1x64xf32, #tpu.memory_space<vmem>>, %arg12: memref<1x256x64xf32, #tpu.memory_space<vmem>>, %arg13: memref<1x1x64xf32, #tpu.memory_space<vmem>>, %arg14: memref<1x64x256xf32, #tpu.memory_space<vmem>>, %arg15: memref<1x24x256xf32, #tpu.memory_space<vmem>>, %arg16: memref<1x1x256xf32, #tpu.memory_space<vmem>>, %arg17: memref<1x256x128xf32, #tpu.memory_space<vmem>>, %arg18: memref<1x1x128xf32, #tpu.memory_space<vmem>>, %arg19: memref<1x8x128xf32, #tpu.memory_space<vmem>>, %arg20: memref<1x8x128xf32, #tpu.memory_space<vmem>>, %arg21: memref<1x8x128xf32, #tpu.memory_space<vmem>>, %arg22: memref<1x8x64xf32, #tpu.memory_space<vmem>>, %arg23: memref<1x8x64xf32, #tpu.memory_space<vmem>>) attributes {dimension_semantics = [#tpu.dimension_semantics<parallel>], iteration_bounds = array<i64: 2>, scalar_prefetch = 0 : i64, scratch_operands = 0 : i64, tpu.core_type = #tpu.core_type<tc>, window_params = [{transform_indices = @transform_0, window_bounds = array<i64: 1, 8, 128>}, {transform_indices = @transform_1, window_bounds = array<i64: 1, 8, 24>}, {transform_indices = @transform_2, window_bounds = array<i64: 1, 8, 64>}, {transform_indices = @transform_3, window_bounds = array<i64: 1, 1, 128>}, {transform_indices = @transform_4, window_bounds = array<i64: 1, 1, 128>}, {transform_indices = @transform_5, window_bounds = array<i64: 1, 1, 128>}, {transform_indices = @transform_6, window_bounds = array<i64: 1, 128, 256>}, {transform_indices = @transform_7, window_bounds = array<i64: 1, 24, 256>}, {transform_indices = @transform_8, window_bounds = array<i64: 1, 1, 256>}, {transform_indices = @transform_9, window_bounds = array<i64: 1, 256, 64>}, {transform_indices = @transform_10, window_bounds = array<i64: 1, 1, 64>}, {transform_indices = @transform_11, window_bounds = array<i64: 1, 256, 64>}, {transform_indices = @transform_12, window_bounds = array<i64: 1, 1, 64>}, {transform_indices = @transform_13, window_bounds = array<i64: 1, 64, 256>}, {transform_indices = @transform_14, window_bounds = array<i64: 1, 24, 256>}, {transform_indices = @transform_15, window_bounds = array<i64: 1, 1, 256>}, {transform_indices = @transform_16, window_bounds = array<i64: 1, 256, 128>}, {transform_indices = @transform_17, window_bounds = array<i64: 1, 1, 128>}, {transform_indices = @transform_18, window_bounds = array<i64: 1, 8, 128>}, {transform_indices = @transform_19, window_bounds = array<i64: 1, 8, 128>}, {transform_indices = @transform_20, window_bounds = array<i64: 1, 8, 128>}, {transform_indices = @transform_21, window_bounds = array<i64: 1, 8, 64>}, {transform_indices = @transform_22, window_bounds = array<i64: 1, 8, 64>}]} {
    %c0 = arith.constant 0 : index
    %c0_0 = arith.constant 0 : index
    %c0_1 = arith.constant 0 : index
    %0 = vector.load %arg1[%c0, %c0_0, %c0_1] : memref<1x8x128xf32, #tpu.memory_space<vmem>>, vector<1x8x128xf32>
    %1 = vector.shape_cast %0 : vector<1x8x128xf32> to vector<8x128xf32>
    %c0_2 = arith.constant 0 : index
    %c0_3 = arith.constant 0 : index
    %c0_4 = arith.constant 0 : index
    %2 = vector.load %arg2[%c0_2, %c0_3, %c0_4] : memref<1x8x24xf32, #tpu.memory_space<vmem>>, vector<1x8x24xf32>
    %3 = vector.shape_cast %2 : vector<1x8x24xf32> to vector<8x24xf32>
    %c0_5 = arith.constant 0 : index
    %c0_6 = arith.constant 0 : index
    %c0_7 = arith.constant 0 : index
    %4 = vector.load %arg3[%c0_5, %c0_6, %c0_7] : memref<1x8x64xf32, #tpu.memory_space<vmem>>, vector<1x8x64xf32>
    %5 = vector.shape_cast %4 : vector<1x8x64xf32> to vector<8x64xf32>
    %c0_8 = arith.constant 0 : index
    %c0_9 = arith.constant 0 : index
    %c0_10 = arith.constant 0 : index
    %6 = vector.load %arg4[%c0_8, %c0_9, %c0_10] : memref<1x1x128xf32, #tpu.memory_space<vmem>>, vector<1x1x128xf32>
    %7 = vector.shape_cast %6 : vector<1x1x128xf32> to vector<1x128xf32>
    %c0_11 = arith.constant 0 : index
    %c0_12 = arith.constant 0 : index
    %c0_13 = arith.constant 0 : index
    %8 = vector.load %arg5[%c0_11, %c0_12, %c0_13] : memref<1x1x128xf32, #tpu.memory_space<vmem>>, vector<1x1x128xf32>
    %9 = vector.shape_cast %8 : vector<1x1x128xf32> to vector<1x128xf32>
    %c0_14 = arith.constant 0 : index
    %c0_15 = arith.constant 0 : index
    %c0_16 = arith.constant 0 : index
    %10 = vector.load %arg6[%c0_14, %c0_15, %c0_16] : memref<1x1x128xf32, #tpu.memory_space<vmem>>, vector<1x1x128xf32>
    %11 = vector.shape_cast %10 : vector<1x1x128xf32> to vector<1x128xf32>
    %12 = vector.broadcast %7 : vector<1x128xf32> to vector<8x128xf32>
    %13 = arith.subf %1, %12 : vector<8x128xf32>
    %14 = vector.broadcast %11 : vector<1x128xf32> to vector<8x128xf32>
    %15 = arith.mulf %13, %14 : vector<8x128xf32>
    %c0_17 = arith.constant 0 : index
    %c0_18 = arith.constant 0 : index
    %c0_19 = arith.constant 0 : index
    %16 = vector.load %arg7[%c0_17, %c0_18, %c0_19] : memref<1x128x256xf32, #tpu.memory_space<vmem>>, vector<1x128x256xf32>
    %17 = vector.shape_cast %16 : vector<1x128x256xf32> to vector<128x256xf32>
    %cst = arith.constant dense<0.000000e+00> : vector<8x256xf32>
    %18 = tpu.matmul %15, %17, %cst {dimension_numbers = #tpu.dot_dimension_numbers<[1], [0], [0], [1], [0, 0, 1, 1], [], []>} : vector<8x128xf32>, vector<128x256xf32>, vector<8x256xf32> -> vector<8x256xf32>
    %c0_20 = arith.constant 0 : index
    %c0_21 = arith.constant 0 : index
    %c0_22 = arith.constant 0 : index
    %19 = vector.load %arg8[%c0_20, %c0_21, %c0_22] : memref<1x24x256xf32, #tpu.memory_space<vmem>>, vector<1x24x256xf32>
    %20 = vector.shape_cast %19 : vector<1x24x256xf32> to vector<24x256xf32>
    %cst_23 = arith.constant dense<0.000000e+00> : vector<8x256xf32>
    %21 = tpu.matmul %3, %20, %cst_23 {dimension_numbers = #tpu.dot_dimension_numbers<[1], [0], [0], [1], [0, 0, 1, 1], [], []>} : vector<8x24xf32>, vector<24x256xf32>, vector<8x256xf32> -> vector<8x256xf32>
    %22 = arith.addf %18, %21 : vector<8x256xf32>
    %c0_24 = arith.constant 0 : index
    %c0_25 = arith.constant 0 : index
    %c0_26 = arith.constant 0 : index
    %23 = vector.load %arg9[%c0_24, %c0_25, %c0_26] : memref<1x1x256xf32, #tpu.memory_space<vmem>>, vector<1x1x256xf32>
    %24 = vector.shape_cast %23 : vector<1x1x256xf32> to vector<1x256xf32>
    %25 = vector.broadcast %24 : vector<1x256xf32> to vector<8x256xf32>
    %26 = arith.addf %22, %25 : vector<8x256xf32>
    %cst_27 = arith.constant 0.000000e+00 : f32
    %27 = vector.broadcast %cst_27 : f32 to vector<8x256xf32>
    %28 = arith.maximumf %26, %27 : vector<8x256xf32>
    %c0_28 = arith.constant 0 : index
    %c0_29 = arith.constant 0 : index
    %c0_30 = arith.constant 0 : index
    %29 = vector.load %arg10[%c0_28, %c0_29, %c0_30] : memref<1x256x64xf32, #tpu.memory_space<vmem>>, vector<1x256x64xf32>
    %30 = vector.shape_cast %29 : vector<1x256x64xf32> to vector<256x64xf32>
    %cst_31 = arith.constant dense<0.000000e+00> : vector<8x64xf32>
    %31 = tpu.matmul %28, %30, %cst_31 {dimension_numbers = #tpu.dot_dimension_numbers<[1], [0], [0], [1], [0, 0, 1, 1], [], []>} : vector<8x256xf32>, vector<256x64xf32>, vector<8x64xf32> -> vector<8x64xf32>
    %c0_32 = arith.constant 0 : index
    %c0_33 = arith.constant 0 : index
    %c0_34 = arith.constant 0 : index
    %32 = vector.load %arg11[%c0_32, %c0_33, %c0_34] : memref<1x1x64xf32, #tpu.memory_space<vmem>>, vector<1x1x64xf32>
    %33 = vector.shape_cast %32 : vector<1x1x64xf32> to vector<1x64xf32>
    %34 = vector.broadcast %33 : vector<1x64xf32> to vector<8x64xf32>
    %35 = arith.addf %31, %34 : vector<8x64xf32>
    %c0_35 = arith.constant 0 : index
    %c0_36 = arith.constant 0 : index
    %c0_37 = arith.constant 0 : index
    %36 = vector.load %arg12[%c0_35, %c0_36, %c0_37] : memref<1x256x64xf32, #tpu.memory_space<vmem>>, vector<1x256x64xf32>
    %37 = vector.shape_cast %36 : vector<1x256x64xf32> to vector<256x64xf32>
    %cst_38 = arith.constant dense<0.000000e+00> : vector<8x64xf32>
    %38 = tpu.matmul %28, %37, %cst_38 {dimension_numbers = #tpu.dot_dimension_numbers<[1], [0], [0], [1], [0, 0, 1, 1], [], []>} : vector<8x256xf32>, vector<256x64xf32>, vector<8x64xf32> -> vector<8x64xf32>
    %c0_39 = arith.constant 0 : index
    %c0_40 = arith.constant 0 : index
    %c0_41 = arith.constant 0 : index
    %39 = vector.load %arg13[%c0_39, %c0_40, %c0_41] : memref<1x1x64xf32, #tpu.memory_space<vmem>>, vector<1x1x64xf32>
    %40 = vector.shape_cast %39 : vector<1x1x64xf32> to vector<1x64xf32>
    %41 = vector.broadcast %40 : vector<1x64xf32> to vector<8x64xf32>
    %42 = arith.addf %38, %41 : vector<8x64xf32>
    %cst_42 = arith.constant 5.000000e-01 : f32
    %43 = vector.broadcast %cst_42 : f32 to vector<8x64xf32>
    %44 = arith.mulf %43, %42 : vector<8x64xf32>
    %45 = math.exp %44 : vector<8x64xf32>
    %46 = arith.mulf %5, %45 : vector<8x64xf32>
    %47 = arith.addf %46, %35 : vector<8x64xf32>
    %c0_43 = arith.constant 0 : index
    %c0_44 = arith.constant 0 : index
    %c0_45 = arith.constant 0 : index
    %48 = vector.load %arg14[%c0_43, %c0_44, %c0_45] : memref<1x64x256xf32, #tpu.memory_space<vmem>>, vector<1x64x256xf32>
    %49 = vector.shape_cast %48 : vector<1x64x256xf32> to vector<64x256xf32>
    %cst_46 = arith.constant dense<0.000000e+00> : vector<8x256xf32>
    %50 = tpu.matmul %47, %49, %cst_46 {dimension_numbers = #tpu.dot_dimension_numbers<[1], [0], [0], [1], [0, 0, 1, 1], [], []>} : vector<8x64xf32>, vector<64x256xf32>, vector<8x256xf32> -> vector<8x256xf32>
    %c0_47 = arith.constant 0 : index
    %c0_48 = arith.constant 0 : index
    %c0_49 = arith.constant 0 : index
    %51 = vector.load %arg15[%c0_47, %c0_48, %c0_49] : memref<1x24x256xf32, #tpu.memory_space<vmem>>, vector<1x24x256xf32>
    %52 = vector.shape_cast %51 : vector<1x24x256xf32> to vector<24x256xf32>
    %cst_50 = arith.constant dense<0.000000e+00> : vector<8x256xf32>
    %53 = tpu.matmul %3, %52, %cst_50 {dimension_numbers = #tpu.dot_dimension_numbers<[1], [0], [0], [1], [0, 0, 1, 1], [], []>} : vector<8x24xf32>, vector<24x256xf32>, vector<8x256xf32> -> vector<8x256xf32>
    %54 = arith.addf %50, %53 : vector<8x256xf32>
    %c0_51 = arith.constant 0 : index
    %c0_52 = arith.constant 0 : index
    %c0_53 = arith.constant 0 : index
    %55 = vector.load %arg16[%c0_51, %c0_52, %c0_53] : memref<1x1x256xf32, #tpu.memory_space<vmem>>, vector<1x1x256xf32>
    %56 = vector.shape_cast %55 : vector<1x1x256xf32> to vector<1x256xf32>
    %57 = vector.broadcast %56 : vector<1x256xf32> to vector<8x256xf32>
    %58 = arith.addf %54, %57 : vector<8x256xf32>
    %cst_54 = arith.constant 0.000000e+00 : f32
    %59 = vector.broadcast %cst_54 : f32 to vector<8x256xf32>
    %60 = arith.maximumf %58, %59 : vector<8x256xf32>
    %c0_55 = arith.constant 0 : index
    %c0_56 = arith.constant 0 : index
    %c0_57 = arith.constant 0 : index
    %61 = vector.load %arg17[%c0_55, %c0_56, %c0_57] : memref<1x256x128xf32, #tpu.memory_space<vmem>>, vector<1x256x128xf32>
    %62 = vector.shape_cast %61 : vector<1x256x128xf32> to vector<256x128xf32>
    %cst_58 = arith.constant dense<0.000000e+00> : vector<8x128xf32>
    %63 = tpu.matmul %60, %62, %cst_58 {dimension_numbers = #tpu.dot_dimension_numbers<[1], [0], [0], [1], [0, 0, 1, 1], [], []>} : vector<8x256xf32>, vector<256x128xf32>, vector<8x128xf32> -> vector<8x128xf32>
    %c0_59 = arith.constant 0 : index
    %c0_60 = arith.constant 0 : index
    %c0_61 = arith.constant 0 : index
    %64 = vector.load %arg18[%c0_59, %c0_60, %c0_61] : memref<1x1x128xf32, #tpu.memory_space<vmem>>, vector<1x1x128xf32>
    %65 = vector.shape_cast %64 : vector<1x1x128xf32> to vector<1x128xf32>
    %66 = vector.broadcast %65 : vector<1x128xf32> to vector<8x128xf32>
    %67 = arith.addf %63, %66 : vector<8x128xf32>
    %68 = vector.broadcast %7 : vector<1x128xf32> to vector<8x128xf32>
    %69 = arith.addf %67, %68 : vector<8x128xf32>
    %70 = vector.broadcast %9 : vector<1x128xf32> to vector<8x128xf32>
    %71 = arith.mulf %69, %70 : vector<8x128xf32>
    %c0_62 = arith.constant 0 : index
    %c0_63 = arith.constant 0 : index
    %c0_64 = arith.constant 0 : index
    %72 = vector.load %arg19[%c0_62, %c0_63, %c0_64] : memref<1x8x128xf32, #tpu.memory_space<vmem>>, vector<1x8x128xf32>
    %73 = vector.shape_cast %72 : vector<1x8x128xf32> to vector<8x128xf32>
    %74 = vector.shape_cast %71 : vector<8x128xf32> to vector<1x8x128xf32>
    tpu.vector_store %arg19[%c0_62, %c0_63, %c0_64], %74 {strides = array<i32>} : memref<1x8x128xf32, #tpu.memory_space<vmem>>, vector<1x8x128xf32>,
    %c0_65 = arith.constant 0 : index
    %c0_66 = arith.constant 0 : index
    %c0_67 = arith.constant 0 : index
    %75 = vector.load %arg20[%c0_65, %c0_66, %c0_67] : memref<1x8x128xf32, #tpu.memory_space<vmem>>, vector<1x8x128xf32>
    %76 = vector.shape_cast %75 : vector<1x8x128xf32> to vector<8x128xf32>
    %77 = vector.shape_cast %15 : vector<8x128xf32> to vector<1x8x128xf32>
    tpu.vector_store %arg20[%c0_65, %c0_66, %c0_67], %77 {strides = array<i32>} : memref<1x8x128xf32, #tpu.memory_space<vmem>>, vector<1x8x128xf32>,
    %c0_68 = arith.constant 0 : index
    %c0_69 = arith.constant 0 : index
    %c0_70 = arith.constant 0 : index
    %78 = vector.load %arg21[%c0_68, %c0_69, %c0_70] : memref<1x8x128xf32, #tpu.memory_space<vmem>>, vector<1x8x128xf32>
    %79 = vector.shape_cast %78 : vector<1x8x128xf32> to vector<8x128xf32>
    %80 = vector.shape_cast %67 : vector<8x128xf32> to vector<1x8x128xf32>
    tpu.vector_store %arg21[%c0_68, %c0_69, %c0_70], %80 {strides = array<i32>} : memref<1x8x128xf32, #tpu.memory_space<vmem>>, vector<1x8x128xf32>,
    %c0_71 = arith.constant 0 : index
    %c0_72 = arith.constant 0 : index
    %c0_73 = arith.constant 0 : index
    %81 = vector.load %arg22[%c0_71, %c0_72, %c0_73] : memref<1x8x64xf32, #tpu.memory_space<vmem>>, vector<1x8x64xf32>
    %82 = vector.shape_cast %81 : vector<1x8x64xf32> to vector<8x64xf32>
    %83 = vector.shape_cast %35 : vector<8x64xf32> to vector<1x8x64xf32>
    tpu.vector_store %arg22[%c0_71, %c0_72, %c0_73], %83 {strides = array<i32>} : memref<1x8x64xf32, #tpu.memory_space<vmem>>, vector<1x8x64xf32>,
    %c0_74 = arith.constant 0 : index
    %c0_75 = arith.constant 0 : index
    %c0_76 = arith.constant 0 : index
    %84 = vector.load %arg23[%c0_74, %c0_75, %c0_76] : memref<1x8x64xf32, #tpu.memory_space<vmem>>, vector<1x8x64xf32>
    %85 = vector.shape_cast %84 : vector<1x8x64xf32> to vector<8x64xf32>
    %86 = vector.shape_cast %42 : vector<8x64xf32> to vector<1x8x64xf32>
    tpu.vector_store %arg23[%c0_74, %c0_75, %c0_76], %86 {strides = array<i32>} : memref<1x8x64xf32, #tpu.memory_space<vmem>>, vector<1x8x64xf32>,
    return
  }
  func.func @transform_0(%arg0: i32) -> (i32, i32, i32) {
    %c0_i32 = arith.constant 0 : i32
    %c0_i32_0 = arith.constant 0 : i32
    %c0_i32_1 = arith.constant 0 : i32
    return %arg0, %c0_i32, %c0_i32_0 : i32, i32, i32
  }
  func.func @transform_1(%arg0: i32) -> (i32, i32, i32) {
    %c0_i32 = arith.constant 0 : i32
    %c0_i32_0 = arith.constant 0 : i32
    %c0_i32_1 = arith.constant 0 : i32
    return %arg0, %c0_i32, %c0_i32_0 : i32, i32, i32
  }
  func.func @transform_2(%arg0: i32) -> (i32, i32, i32) {
    %c0_i32 = arith.constant 0 : i32
    %c0_i32_0 = arith.constant 0 : i32
    %c0_i32_1 = arith.constant 0 : i32
    return %arg0, %c0_i32, %c0_i32_0 : i32, i32, i32
  }
  func.func @transform_3(%arg0: i32) -> (i32, i32, i32) {
    %c0_i32 = arith.constant 0 : i32
    %c0_i32_0 = arith.constant 0 : i32
    %c0_i32_1 = arith.constant 0 : i32
    return %arg0, %c0_i32, %c0_i32_0 : i32, i32, i32
  }
  func.func @transform_4(%arg0: i32) -> (i32, i32, i32) {
    %c0_i32 = arith.constant 0 : i32
    %c0_i32_0 = arith.constant 0 : i32
    %c0_i32_1 = arith.constant 0 : i32
    return %arg0, %c0_i32, %c0_i32_0 : i32, i32, i32
  }
  func.func @transform_5(%arg0: i32) -> (i32, i32, i32) {
    %c0_i32 = arith.constant 0 : i32
    %c0_i32_0 = arith.constant 0 : i32
    %c0_i32_1 = arith.constant 0 : i32
    return %arg0, %c0_i32, %c0_i32_0 : i32, i32, i32
  }
  func.func @transform_6(%arg0: i32) -> (i32, i32, i32) {
    %c0_i32 = arith.constant 0 : i32
    %c0_i32_0 = arith.constant 0 : i32
    %c0_i32_1 = arith.constant 0 : i32
    return %arg0, %c0_i32, %c0_i32_0 : i32, i32, i32
  }
  func.func @transform_7(%arg0: i32) -> (i32, i32, i32) {
    %c0_i32 = arith.constant 0 : i32
    %c0_i32_0 = arith.constant 0 : i32
    %c0_i32_1 = arith.constant 0 : i32
    return %arg0, %c0_i32, %c0_i32_0 : i32, i32, i32
  }
  func.func @transform_8(%arg0: i32) -> (i32, i32, i32) {
    %c0_i32 = arith.constant 0 : i32
    %c0_i32_0 = arith.constant 0 : i32
    %c0_i32_1 = arith.constant 0 : i32
    return %arg0, %c0_i32, %c0_i32_0 : i32, i32, i32
  }
  func.func @transform_9(%arg0: i32) -> (i32, i32, i32) {
    %c0_i32 = arith.constant 0 : i32
    %c0_i32_0 = arith.constant 0 : i32
    %c0_i32_1 = arith.constant 0 : i32
    return %arg0, %c0_i32, %c0_i32_0 : i32, i32, i32
  }
  func.func @transform_10(%arg0: i32) -> (i32, i32, i32) {
    %c0_i32 = arith.constant 0 : i32
    %c0_i32_0 = arith.constant 0 : i32
    %c0_i32_1 = arith.constant 0 : i32
    return %arg0, %c0_i32, %c0_i32_0 : i32, i32, i32
  }
  func.func @transform_11(%arg0: i32) -> (i32, i32, i32) {
    %c0_i32 = arith.constant 0 : i32
    %c0_i32_0 = arith.constant 0 : i32
    %c0_i32_1 = arith.constant 0 : i32
    return %arg0, %c0_i32, %c0_i32_0 : i32, i32, i32
  }
  func.func @transform_12(%arg0: i32) -> (i32, i32, i32) {
    %c0_i32 = arith.constant 0 : i32
    %c0_i32_0 = arith.constant 0 : i32
    %c0_i32_1 = arith.constant 0 : i32
    return %arg0, %c0_i32, %c0_i32_0 : i32, i32, i32
  }
  func.func @transform_13(%arg0: i32) -> (i32, i32, i32) {
    %c0_i32 = arith.constant 0 : i32
    %c0_i32_0 = arith.constant 0 : i32
    %c0_i32_1 = arith.constant 0 : i32
    return %arg0, %c0_i32, %c0_i32_0 : i32, i32, i32
  }
  func.func @transform_14(%arg0: i32) -> (i32, i32, i32) {
    %c0_i32 = arith.constant 0 : i32
    %c0_i32_0 = arith.constant 0 : i32
    %c0_i32_1 = arith.constant 0 : i32
    return %arg0, %c0_i32, %c0_i32_0 : i32, i32, i32
  }
  func.func @transform_15(%arg0: i32) -> (i32, i32, i32) {
    %c0_i32 = arith.constant 0 : i32
    %c0_i32_0 = arith.constant 0 : i32
    %c0_i32_1 = arith.constant 0 : i32
    return %arg0, %c0_i32, %c0_i32_0 : i32, i32, i32
  }
  func.func @transform_16(%arg0: i32) -> (i32, i32, i32) {
    %c0_i32 = arith.constant 0 : i32
    %c0_i32_0 = arith.constant 0 : i32
    %c0_i32_1 = arith.constant 0 : i32
    return %arg0, %c0_i32, %c0_i32_0 : i32, i32, i32
  }
  func.func @transform_17(%arg0: i32) -> (i32, i32, i32) {
    %c0_i32 = arith.constant 0 : i32
    %c0_i32_0 = arith.constant 0 : i32
    %c0_i32_1 = arith.constant 0 : i32
    return %arg0, %c0_i32, %c0_i32_0 : i32, i32, i32
  }
  func.func @transform_18(%arg0: i32) -> (i32, i32, i32) {
    %c0_i32 = arith.constant 0 : i32
    %c0_i32_0 = arith.constant 0 : i32
    %c0_i32_1 = arith.constant 0 : i32
    return %arg0, %c0_i32, %c0_i32_0 : i32, i32, i32
  }
  func.func @transform_19(%arg0: i32) -> (i32, i32, i32) {
    %c0_i32 = arith.constant 0 : i32
    %c0_i32_0 = arith.constant 0 : i32
    %c0_i32_1 = arith.constant 0 : i32
    return %arg0, %c0_i32, %c0_i32_0 : i32, i32, i32
  }
  func.func @transform_20(%arg0: i32) -> (i32, i32, i32) {
    %c0_i32 = arith.constant 0 : i32
    %c0_i32_0 = arith.constant 0 : i32
    %c0_i32_1 = arith.constant 0 : i32
    return %arg0, %c0_i32, %c0_i32_0 : i32, i32, i32
  }
  func.func @transform_21(%arg0: i32) -> (i32, i32, i32) {
    %c0_i32 = arith.constant 0 : i32
    %c0_i32_0 = arith.constant 0 : i32
    %c0_i32_1 = arith.constant 0 : i32
    return %arg0, %c0_i32, %c0_i32_0 : i32, i32, i32
  }
  func.func @transform_22(%arg0: i32) -> (i32, i32, i32) {
    %c0_i32 = arith.constant 0 : i32
    %c0_i32_0 = arith.constant 0 : i32
    %c0_i32_1 = arith.constant 0 : i32
    return %arg0, %c0_i32, %c0_i32_0 : i32, i32, i32
  }
}

</mosaic_0001>

<llo_original>
// kernel: tpu_custom_call.1
$region0: #{tpu_custom_call.1}
  #allocation0 [shape = 'u32[]', space=smem, size = 0x4, offset = 0x4, fixed_abs, tag = 'smem constant byte address 0x4 - core index']
  #allocation1 [shape = 'u32[144,128]{1,0:T(1,128)}', space=vmem, size = 0x12000, scoped, tag = 'internal scratch']
  %s0 = inlined_call_operand.hbm [shape: f32[2,8,128], index: 0, kind: input, shape index: {}]
  %s1 = inlined_call_operand.hbm [shape: f32[2,8,24], index: 1, kind: input, shape index: {}]
  %s2 = inlined_call_operand.hbm [shape: f32[2,8,64], index: 2, kind: input, shape index: {}]
  %s3 = inlined_call_operand.hbm [shape: f32[2,1,128], index: 3, kind: input, shape index: {}]
  %s4 = inlined_call_operand.hbm [shape: f32[2,1,128], index: 4, kind: input, shape index: {}]
  %s5 = inlined_call_operand.hbm [shape: f32[2,1,128], index: 5, kind: input, shape index: {}]
  %s6 = inlined_call_operand.vmem [shape: f32[2,128,256], index: 6, kind: input, shape index: {}]
  %s7 = inlined_call_operand.hbm [shape: f32[2,24,256], index: 7, kind: input, shape index: {}]
  %s8 = inlined_call_operand.hbm [shape: f32[2,1,256], index: 8, kind: input, shape index: {}]
  %s9 = inlined_call_operand.vmem [shape: f32[2,256,64], index: 9, kind: input, shape index: {}]
  %s10 = inlined_call_operand.vmem [shape: f32[2,1,64], index: 10, kind: input, shape index: {}]
  %s11 = inlined_call_operand.vmem [shape: f32[2,256,64], index: 11, kind: input, shape index: {}]
  %s12 = inlined_call_operand.vmem [shape: f32[2,1,64], index: 12, kind: input, shape index: {}]
  %s13 = inlined_call_operand.vmem [shape: f32[2,64,256], index: 13, kind: input, shape index: {}]
  %s14 = inlined_call_operand.hbm [shape: f32[2,24,256], index: 14, kind: input, shape index: {}]
  %s15 = inlined_call_operand.vmem [shape: f32[2,1,256], index: 15, kind: input, shape index: {}]
  %s16 = inlined_call_operand.vmem [shape: f32[2,256,128], index: 16, kind: input, shape index: {}]
  %s17 = inlined_call_operand.vmem [shape: f32[2,1,128], index: 17, kind: input, shape index: {}]
  %s18 = inlined_call_operand.hbm [shape: f32[2,8,128], index: 18, kind: output, shape index: {0}]
  %s19 = inlined_call_operand.hbm [shape: f32[2,8,128], index: 19, kind: output, shape index: {1}]
  %s20 = inlined_call_operand.hbm [shape: f32[2,8,128], index: 20, kind: output, shape index: {2}]
  %s21 = inlined_call_operand.hbm [shape: f32[2,8,64], index: 21, kind: output, shape index: {3}]
  %s22 = inlined_call_operand.hbm [shape: f32[2,8,64], index: 22, kind: output, shape index: {4}]
  %23 = xla_tuple %s18, %s19, %s20, %s21, %s22
  %s24 = sld [smem:[#allocation0]]
  $region173: #{tpu_custom_call.1} parent=0
    _
  %s26 = ssub.s32 1, %s24
  %s27 = scalar_select 0, %s26, %s24
  $region1: #{tpu_custom_call.1} parent=0
    #allocation2 [shape = 'u8[8192]{0}', space=vmem, size = 0x2000, scoped, tag = 'input window, operand 0']
    #allocation3 [shape = 's32[2]{0}', space=sflag, size = 0x8, scoped, tag = 'scoped memory for tpu_custom_call.1']
    #allocation4 [shape = 's32[2]{0}', space=sflag, size = 0x8, scoped, tag = 'scoped memory for tpu_custom_call.1']
    #allocation5 [shape = 'u8[8192]{0}', space=vmem, size = 0x2000, scoped, tag = 'input window, operand 1']
    #allocation6 [shape = 's32[2]{0}', space=sflag, size = 0x8, scoped, tag = 'scoped memory for tpu_custom_call.1']
    #allocation7 [shape = 'u8[8192]{0}', space=vmem, size = 0x2000, scoped, tag = 'input window, operand 2']
    #allocation8 [shape = 'u8[1024]{0}', space=vmem, size = 0x400, scoped, tag = 'input window, operand 3']
    #allocation9 [shape = 's32[2]{0}', space=sflag, size = 0x8, scoped, tag = 'scoped memory for tpu_custom_call.1']
    #allocation10 [shape = 'u8[1024]{0}', space=vmem, size = 0x400, scoped, tag = 'input window, operand 4']
    #allocation11 [shape = 'u8[1024]{0}', space=vmem, size = 0x400, scoped, tag = 'input window, operand 5']
    #allocation12 [shape = 's32[2]{0}', space=sflag, size = 0x8, scoped, tag = 'scoped memory for tpu_custom_call.1']
    #allocation13 [shape = 'u8[49152]{0}', space=vmem, size = 0xc000, scoped, tag = 'input window, operand 7']
    #allocation14 [shape = 'u8[2048]{0}', space=vmem, size = 0x800, scoped, tag = 'input window, operand 8']
    #allocation15 [shape = 's32[2]{0}', space=sflag, size = 0x8, scoped, tag = 'scoped memory for tpu_custom_call.1']
    #allocation16 [shape = 'u8[49152]{0}', space=vmem, size = 0xc000, scoped, tag = 'input window, operand 14']
    #allocation17 [shape = 'u8[8192]{0}', space=vmem, size = 0x2000, scoped, tag = 'output window, operand 0']
    #allocation18 [shape = 'u8[8192]{0}', space=vmem, size = 0x2000, scoped, tag = 'output window, operand 1']
    #allocation19 [shape = 's32[2]{0}', space=sflag, size = 0x8, scoped, tag = 'scoped memory for tpu_custom_call.1']
    #allocation20 [shape = 'u8[8192]{0}', space=vmem, size = 0x2000, scoped, tag = 'output window, operand 2']
    #allocation21 [shape = 'u8[8192]{0}', space=vmem, size = 0x2000, scoped, tag = 'output window, operand 3']
    #allocation22 [shape = 's32[2]{0}', space=sflag, size = 0x8, scoped, tag = 'scoped memory for tpu_custom_call.1']
    #allocation23 [shape = 'u8[8192]{0}', space=vmem, size = 0x2000, scoped, tag = 'output window, operand 4']
    %28 = vsyncpa [#allocation3], 0
    %s29 = scalar_lea.sflag [#allocation3], 1
    %30 = vsyncpa %s29, 0
    %31 = vsyncpa [#allocation6], 0
    %s32 = scalar_lea.sflag [#allocation6], 1
    %33 = vsyncpa %s32, 0
    %34 = vsyncpa [#allocation9], 0
    %s35 = scalar_lea.sflag [#allocation9], 1
    %36 = vsyncpa %s35, 0
    %37 = vsyncpa [#allocation12], 0
    %s38 = scalar_lea.sflag [#allocation12], 1
    %39 = vsyncpa %s38, 0
    %40 = vsyncpa [#allocation15], 0
    %s41 = scalar_lea.sflag [#allocation15], 1
    %42 = vsyncpa %s41, 0
    %43 = vsyncpa [#allocation4], 0
    %s44 = scalar_lea.sflag [#allocation4], 1
    %45 = vsyncpa %s44, 0
    %46 = vsyncpa [#allocation19], 0
    %s47 = scalar_lea.sflag [#allocation19], 1
    %48 = vsyncpa %s47, 0
    %49 = vsyncpa [#allocation22], 0
    %s50 = scalar_lea.sflag [#allocation22], 1
    %51 = vsyncpa %s50, 0
    loop: start=0, step=1, limit=4
    $region2: #{tpu_custom_call.1} parent=1 // loop_pre_header
      _
    $region3: #{tpu_custom_call.1} parent=1 // loop_header
      %s53 = sphi 0, %s57
      %p54 = scmp.ge.s32.totalorder %s53, 4
      %s63 = sphi 0, %s65
      %s66 = sphi 0, %s63
      %s67 = sphi 0, %s66
      %s83 = sphi 0, %s67
      %s89 = sphi 0, %s91
      %s92 = sphi 0, %s89
      %s93 = sphi 0, %s92
      %s109 = sphi 0, %s93
      %s115 = sphi 0, %s117
      %s118 = sphi 0, %s115
      %s119 = sphi 0, %s118
      %s135 = sphi 0, %s119
      %s141 = sphi 0, %s143
      %s144 = sphi 0, %s141
      %s145 = sphi 0, %s144
      %s161 = sphi 0, %s145
      %s167 = sphi 0, %s169
      %s170 = sphi 0, %s167
      %s171 = sphi 0, %s170
      %s187 = sphi 0, %s171
      %s193 = sphi 0, %s195
      %s196 = sphi 0, %s193
      %s197 = sphi 0, %s196
      %s213 = sphi 0, %s197
      %s219 = sphi 0, %s221
      %s222 = sphi 0, %s219
      %s223 = sphi 0, %s222
      %s239 = sphi 0, %s223
      %s245 = sphi 0, %s247
      %s248 = sphi 0, %s245
      %s249 = sphi 0, %s248
      %s265 = sphi 0, %s249
      %s271 = sphi 0, %s273
      %s274 = sphi 0, %s271
      %s275 = sphi 0, %s274
      %s291 = sphi 0, %s275
      %s297 = sphi 0, %s299
      %s300 = sphi 0, %s297
      %s301 = sphi 0, %s300
      %s317 = sphi 0, %s301
      %s323 = sphi 0, %s325
      %s326 = sphi 0, %s323
      %s327 = sphi 0, %s326
      %s343 = sphi 0, %s327
      %s349 = sphi 0, %s351
      %s352 = sphi 0, %s349
      %s353 = sphi 0, %s352
      %s369 = sphi 0, %s353
      %s375 = sphi 0, %s377
      %s378 = sphi 0, %s375
      %s379 = sphi 0, %s378
      %s395 = sphi 0, %s379
      %s401 = sphi 0, %s403
      %s404 = sphi 0, %s401
      %s405 = sphi 0, %s404
      %s421 = sphi 0, %s405
      %s427 = sphi 0, %s429
      %s430 = sphi 0, %s427
      %s431 = sphi 0, %s430
      %s447 = sphi 0, %s431
      %s453 = sphi 0, %s455
      %s456 = sphi 0, %s453
      %s457 = sphi 0, %s456
      %s473 = sphi 0, %s457
      %s479 = sphi 0, %s481
      %s482 = sphi 0, %s479
      %s483 = sphi 0, %s482
      %s499 = sphi 0, %s483
      %s505 = sphi 0, %s507
      %s508 = sphi 0, %s505
      %s509 = sphi 0, %s508
      %s525 = sphi 0, %s509
      %s531 = sphi 0, %s533
      %s534 = sphi 0, %s531
      %s535 = sphi 0, %s534
      %s551 = sphi 0, %s535
      %s557 = sphi 0, %s559
      %s560 = sphi 0, %s557
      %s561 = sphi 0, %s560
      %s577 = sphi 0, %s561
      %s583 = sphi 0, %s585
      %s586 = sphi 0, %s583
      %s587 = sphi 0, %s586
      %s603 = sphi 0, %s587
      %s609 = sphi 0, %s611
      %s612 = sphi 0, %s609
      %s613 = sphi 0, %s612
      %s629 = sphi 0, %s613
      %s635 = sphi 0, %s637
      %s638 = sphi 0, %s635
      %s639 = sphi 0, %s638
      %s655 = sphi 0, %s639
    $region4: #{tpu_custom_call.1} parent=1 // loop_header_branch
      %56 = sbr.rel (%p54) target = $region8
    $region5: #{tpu_custom_call.1} parent=1 // loop_body
      %s58 = ssub.s32 %s53, 1
      %s59 = ssub.s32 %s53, 2
      %s60 = sadd.s32 %s53, 1
      %s61 = ssub.s32 %s53, %s60
      %p62 = scmp.eq.s32.totalorder %s61, 0
      %s64 = sadd.s32 %s63, 1
      %s65 = scalar_select %p62, %s63, %s64
      %p68 = pneg %p62
      %p69 = scmp.eq.s32.totalorder %s53, 1
      %p70 = por %p68, %p69
      %p71 = scmp.ne.s32.totalorder %s63, %s66
      %p72 = scmp.eq.s32.totalorder %s53, 0
      %p73 = por %p71, %p72
      %p74 = scmp.ne.s32.totalorder %s63, %s66
      %p75 = scmp.eq.s32.totalorder %s58, 1
      %p76 = por %p74, %p75
      %p77 = scmp.ne.s32.totalorder %s66, %s67
      %p78 = scmp.eq.s32.totalorder %s58, 0
      %p79 = por %p77, %p78
      %p80 = scmp.ne.s32.totalorder %s66, %s67
      %p81 = scmp.eq.s32.totalorder %s59, 1
      %p82 = por %p80, %p81
      %p84 = scmp.ne.s32.totalorder %s67, %s83
      %p85 = scmp.eq.s32.totalorder %s59, 0
      %p86 = por %p84, %p85
      %s87 = ssub.s32 %s53, %s60
      %p88 = scmp.eq.s32.totalorder %s87, 0
      %s90 = sadd.s32 %s89, 1
      %s91 = scalar_select %p88, %s89, %s90
      %p94 = pneg %p88
      %p95 = scmp.eq.s32.totalorder %s53, 1
      %p96 = por %p94, %p95
      %p97 = scmp.ne.s32.totalorder %s89, %s92
      %p98 = scmp.eq.s32.totalorder %s53, 0
      %p99 = por %p97, %p98
      %p100 = scmp.ne.s32.totalorder %s89, %s92
      %p101 = scmp.eq.s32.totalorder %s58, 1
      %p102 = por %p100, %p101
      %p103 = scmp.ne.s32.totalorder %s92, %s93
      %p104 = scmp.eq.s32.totalorder %s58, 0
      %p105 = por %p103, %p104
      %p106 = scmp.ne.s32.totalorder %s92, %s93
      %p107 = scmp.eq.s32.totalorder %s59, 1
      %p108 = por %p106, %p107
      %p110 = scmp.ne.s32.totalorder %s93, %s109
      %p111 = scmp.eq.s32.totalorder %s59, 0
      %p112 = por %p110, %p111
      %s113 = ssub.s32 %s53, %s60
      %p114 = scmp.eq.s32.totalorder %s113, 0
      %s116 = sadd.s32 %s115, 1
      %s117 = scalar_select %p114, %s115, %s116
      %p120 = pneg %p114
      %p121 = scmp.eq.s32.totalorder %s53, 1
      %p122 = por %p120, %p121
      %p123 = scmp.ne.s32.totalorder %s115, %s118
      %p124 = scmp.eq.s32.totalorder %s53, 0
      %p125 = por %p123, %p124
      %p126 = scmp.ne.s32.totalorder %s115, %s118
      %p127 = scmp.eq.s32.totalorder %s58, 1
      %p128 = por %p126, %p127
      %p129 = scmp.ne.s32.totalorder %s118, %s119
      %p130 = scmp.eq.s32.totalorder %s58, 0
      %p131 = por %p129, %p130
      %p132 = scmp.ne.s32.totalorder %s118, %s119
      %p133 = scmp.eq.s32.totalorder %s59, 1
      %p134 = por %p132, %p133
      %p136 = scmp.ne.s32.totalorder %s119, %s135
      %p137 = scmp.eq.s32.totalorder %s59, 0
      %p138 = por %p136, %p137
      %s139 = ssub.s32 %s53, %s60
      %p140 = scmp.eq.s32.totalorder %s139, 0
      %s142 = sadd.s32 %s141, 1
      %s143 = scalar_select %p140, %s141, %s142
      %p146 = pneg %p140
      %p147 = scmp.eq.s32.totalorder %s53, 1
      %p148 = por %p146, %p147
      %p149 = scmp.ne.s32.totalorder %s141, %s144
      %p150 = scmp.eq.s32.totalorder %s53, 0
      %p151 = por %p149, %p150
      %p152 = scmp.ne.s32.totalorder %s141, %s144
      %p153 = scmp.eq.s32.totalorder %s58, 1
      %p154 = por %p152, %p153
      %p155 = scmp.ne.s32.totalorder %s144, %s145
      %p156 = scmp.eq.s32.totalorder %s58, 0
      %p157 = por %p155, %p156
      %p158 = scmp.ne.s32.totalorder %s144, %s145
      %p159 = scmp.eq.s32.totalorder %s59, 1
      %p160 = por %p158, %p159
      %p162 = scmp.ne.s32.totalorder %s145, %s161
      %p163 = scmp.eq.s32.totalorder %s59, 0
      %p164 = por %p162, %p163
      %s165 = ssub.s32 %s53, %s60
      %p166 = scmp.eq.s32.totalorder %s165, 0
      %s168 = sadd.s32 %s167, 1
      %s169 = scalar_select %p166, %s167, %s168
      %p172 = pneg %p166
      %p173 = scmp.eq.s32.totalorder %s53, 1
      %p174 = por %p172, %p173
      %p175 = scmp.ne.s32.totalorder %s167, %s170
      %p176 = scmp.eq.s32.totalorder %s53, 0
      %p177 = por %p175, %p176
      %p178 = scmp.ne.s32.totalorder %s167, %s170
      %p179 = scmp.eq.s32.totalorder %s58, 1
      %p180 = por %p178, %p179
      %p181 = scmp.ne.s32.totalorder %s170, %s171
      %p182 = scmp.eq.s32.totalorder %s58, 0
      %p183 = por %p181, %p182
      %p184 = scmp.ne.s32.totalorder %s170, %s171
      %p185 = scmp.eq.s32.totalorder %s59, 1
      %p186 = por %p184, %p185
      %p188 = scmp.ne.s32.totalorder %s171, %s187
      %p189 = scmp.eq.s32.totalorder %s59, 0
      %p190 = por %p188, %p189
      %s191 = ssub.s32 %s53, %s60
      %p192 = scmp.eq.s32.totalorder %s191, 0
      %s194 = sadd.s32 %s193, 1
      %s195 = scalar_select %p192, %s193, %s194
      %p198 = pneg %p192
      %p199 = scmp.eq.s32.totalorder %s53, 1
      %p200 = por %p198, %p199
      %p201 = scmp.ne.s32.totalorder %s193, %s196
      %p202 = scmp.eq.s32.totalorder %s53, 0
      %p203 = por %p201, %p202
      %p204 = scmp.ne.s32.totalorder %s193, %s196
      %p205 = scmp.eq.s32.totalorder %s58, 1
      %p206 = por %p204, %p205
      %p207 = scmp.ne.s32.totalorder %s196, %s197
      %p208 = scmp.eq.s32.totalorder %s58, 0
      %p209 = por %p207, %p208
      %p210 = scmp.ne.s32.totalorder %s196, %s197
      %p211 = scmp.eq.s32.totalorder %s59, 1
      %p212 = por %p210, %p211
      %p214 = scmp.ne.s32.totalorder %s197, %s213
      %p215 = scmp.eq.s32.totalorder %s59, 0
      %p216 = por %p214, %p215
      %s217 = ssub.s32 %s53, %s60
      %p218 = scmp.eq.s32.totalorder %s217, 0
      %s220 = sadd.s32 %s219, 1
      %s221 = scalar_select %p218, %s219, %s220
      %p224 = pneg %p218
      %p225 = scmp.eq.s32.totalorder %s53, 1
      %p226 = por %p224, %p225
      %p227 = scmp.ne.s32.totalorder %s219, %s222
      %p228 = scmp.eq.s32.totalorder %s53, 0
      %p229 = por %p227, %p228
      %p230 = scmp.ne.s32.totalorder %s219, %s222
      %p231 = scmp.eq.s32.totalorder %s58, 1
      %p232 = por %p230, %p231
      %p233 = scmp.ne.s32.totalorder %s222, %s223
      %p234 = scmp.eq.s32.totalorder %s58, 0
      %p235 = por %p233, %p234
      %p236 = scmp.ne.s32.totalorder %s222, %s223
      %p237 = scmp.eq.s32.totalorder %s59, 1
      %p238 = por %p236, %p237
      %p240 = scmp.ne.s32.totalorder %s223, %s239
      %p241 = scmp.eq.s32.totalorder %s59, 0
      %p242 = por %p240, %p241
      %s243 = ssub.s32 %s53, %s60
      %p244 = scmp.eq.s32.totalorder %s243, 0
      %s246 = sadd.s32 %s245, 1
      %s247 = scalar_select %p244, %s245, %s246
      %p250 = pneg %p244
      %p251 = scmp.eq.s32.totalorder %s53, 1
      %p252 = por %p250, %p251
      %p253 = scmp.ne.s32.totalorder %s245, %s248
      %p254 = scmp.eq.s32.totalorder %s53, 0
      %p255 = por %p253, %p254
      %p256 = scmp.ne.s32.totalorder %s245, %s248
      %p257 = scmp.eq.s32.totalorder %s58, 1
      %p258 = por %p256, %p257
      %p259 = scmp.ne.s32.totalorder %s248, %s249
      %p260 = scmp.eq.s32.totalorder %s58, 0
      %p261 = por %p259, %p260
      %p262 = scmp.ne.s32.totalorder %s248, %s249
      %p263 = scmp.eq.s32.totalorder %s59, 1
      %p264 = por %p262, %p263
      %p266 = scmp.ne.s32.totalorder %s249, %s265
      %p267 = scmp.eq.s32.totalorder %s59, 0
      %p268 = por %p266, %p267
      %s269 = ssub.s32 %s53, %s60
      %p270 = scmp.eq.s32.totalorder %s269, 0
      %s272 = sadd.s32 %s271, 1
      %s273 = scalar_select %p270, %s271, %s272
      %p276 = pneg %p270
      %p277 = scmp.eq.s32.totalorder %s53, 1
      %p278 = por %p276, %p277
      %p279 = scmp.ne.s32.totalorder %s271, %s274
      %p280 = scmp.eq.s32.totalorder %s53, 0
      %p281 = por %p279, %p280
      %p282 = scmp.ne.s32.totalorder %s271, %s274
      %p283 = scmp.eq.s32.totalorder %s58, 1
      %p284 = por %p282, %p283
      %p285 = scmp.ne.s32.totalorder %s274, %s275
      %p286 = scmp.eq.s32.totalorder %s58, 0
      %p287 = por %p285, %p286
      %p288 = scmp.ne.s32.totalorder %s274, %s275
      %p289 = scmp.eq.s32.totalorder %s59, 1
      %p290 = por %p288, %p289
      %p292 = scmp.ne.s32.totalorder %s275, %s291
      %p293 = scmp.eq.s32.totalorder %s59, 0
      %p294 = por %p292, %p293
      %s295 = ssub.s32 %s53, %s60
      %p296 = scmp.eq.s32.totalorder %s295, 0
      %s298 = sadd.s32 %s297, 1
      %s299 = scalar_select %p296, %s297, %s298
      %p302 = pneg %p296
      %p303 = scmp.eq.s32.totalorder %s53, 1
      %p304 = por %p302, %p303
      %p305 = scmp.ne.s32.totalorder %s297, %s300
      %p306 = scmp.eq.s32.totalorder %s53, 0
      %p307 = por %p305, %p306
      %p308 = scmp.ne.s32.totalorder %s297, %s300
      %p309 = scmp.eq.s32.totalorder %s58, 1
      %p310 = por %p308, %p309
      %p311 = scmp.ne.s32.totalorder %s300, %s301
      %p312 = scmp.eq.s32.totalorder %s58, 0
      %p313 = por %p311, %p312
      %p314 = scmp.ne.s32.totalorder %s300, %s301
      %p315 = scmp.eq.s32.totalorder %s59, 1
      %p316 = por %p314, %p315
      %p318 = scmp.ne.s32.totalorder %s301, %s317
      %p319 = scmp.eq.s32.totalorder %s59, 0
      %p320 = por %p318, %p319
      %s321 = ssub.s32 %s53, %s60
      %p322 = scmp.eq.s32.totalorder %s321, 0
      %s324 = sadd.s32 %s323, 1
      %s325 = scalar_select %p322, %s323, %s324
      %p328 = pneg %p322
      %p329 = scmp.eq.s32.totalorder %s53, 1
      %p330 = por %p328, %p329
      %p331 = scmp.ne.s32.totalorder %s323, %s326
      %p332 = scmp.eq.s32.totalorder %s53, 0
      %p333 = por %p331, %p332
      %p334 = scmp.ne.s32.totalorder %s323, %s326
      %p335 = scmp.eq.s32.totalorder %s58, 1
      %p336 = por %p334, %p335
      %p337 = scmp.ne.s32.totalorder %s326, %s327
      %p338 = scmp.eq.s32.totalorder %s58, 0
      %p339 = por %p337, %p338
      %p340 = scmp.ne.s32.totalorder %s326, %s327
      %p341 = scmp.eq.s32.totalorder %s59, 1
      %p342 = por %p340, %p341
      %p344 = scmp.ne.s32.totalorder %s327, %s343
      %p345 = scmp.eq.s32.totalorder %s59, 0
      %p346 = por %p344, %p345
      %s347 = ssub.s32 %s53, %s60
      %p348 = scmp.eq.s32.totalorder %s347, 0
      %s350 = sadd.s32 %s349, 1
      %s351 = scalar_select %p348, %s349, %s350
      %p354 = pneg %p348
      %p355 = scmp.eq.s32.totalorder %s53, 1
      %p356 = por %p354, %p355
      %p357 = scmp.ne.s32.totalorder %s349, %s352
      %p358 = scmp.eq.s32.totalorder %s53, 0
      %p359 = por %p357, %p358
      %p360 = scmp.ne.s32.totalorder %s349, %s352
      %p361 = scmp.eq.s32.totalorder %s58, 1
      %p362 = por %p360, %p361
      %p363 = scmp.ne.s32.totalorder %s352, %s353
      %p364 = scmp.eq.s32.totalorder %s58, 0
      %p365 = por %p363, %p364
      %p366 = scmp.ne.s32.totalorder %s352, %s353
      %p367 = scmp.eq.s32.totalorder %s59, 1
      %p368 = por %p366, %p367
      %p370 = scmp.ne.s32.totalorder %s353, %s369
      %p371 = scmp.eq.s32.totalorder %s59, 0
      %p372 = por %p370, %p371
      %s373 = ssub.s32 %s53, %s60
      %p374 = scmp.eq.s32.totalorder %s373, 0
      %s376 = sadd.s32 %s375, 1
      %s377 = scalar_select %p374, %s375, %s376
      %p380 = pneg %p374
      %p381 = scmp.eq.s32.totalorder %s53, 1
      %p382 = por %p380, %p381
      %p383 = scmp.ne.s32.totalorder %s375, %s378
      %p384 = scmp.eq.s32.totalorder %s53, 0
      %p385 = por %p383, %p384
      %p386 = scmp.ne.s32.totalorder %s375, %s378
      %p387 = scmp.eq.s32.totalorder %s58, 1
      %p388 = por %p386, %p387
      %p389 = scmp.ne.s32.totalorder %s378, %s379
      %p390 = scmp.eq.s32.totalorder %s58, 0
      %p391 = por %p389, %p390
      %p392 = scmp.ne.s32.totalorder %s378, %s379
      %p393 = scmp.eq.s32.totalorder %s59, 1
      %p394 = por %p392, %p393
      %p396 = scmp.ne.s32.totalorder %s379, %s395
      %p397 = scmp.eq.s32.totalorder %s59, 0
      %p398 = por %p396, %p397
      %s399 = ssub.s32 %s53, %s60
      %p400 = scmp.eq.s32.totalorder %s399, 0
      %s402 = sadd.s32 %s401, 1
      %s403 = scalar_select %p400, %s401, %s402
      %p406 = pneg %p400
      %p407 = scmp.eq.s32.totalorder %s53, 1
      %p408 = por %p406, %p407
      %p409 = scmp.ne.s32.totalorder %s401, %s404
      %p410 = scmp.eq.s32.totalorder %s53, 0
      %p411 = por %p409, %p410
      %p412 = scmp.ne.s32.totalorder %s401, %s404
      %p413 = scmp.eq.s32.totalorder %s58, 1
      %p414 = por %p412, %p413
      %p415 = scmp.ne.s32.totalorder %s404, %s405
      %p416 = scmp.eq.s32.totalorder %s58, 0
      %p417 = por %p415, %p416
      %p418 = scmp.ne.s32.totalorder %s404, %s405
      %p419 = scmp.eq.s32.totalorder %s59, 1
      %p420 = por %p418, %p419
      %p422 = scmp.ne.s32.totalorder %s405, %s421
      %p423 = scmp.eq.s32.totalorder %s59, 0
      %p424 = por %p422, %p423
      %s425 = ssub.s32 %s53, %s60
      %p426 = scmp.eq.s32.totalorder %s425, 0
      %s428 = sadd.s32 %s427, 1
      %s429 = scalar_select %p426, %s427, %s428
      %p432 = pneg %p426
      %p433 = scmp.eq.s32.totalorder %s53, 1
      %p434 = por %p432, %p433
      %p435 = scmp.ne.s32.totalorder %s427, %s430
      %p436 = scmp.eq.s32.totalorder %s53, 0
      %p437 = por %p435, %p436
      %p438 = scmp.ne.s32.totalorder %s427, %s430
      %p439 = scmp.eq.s32.totalorder %s58, 1
      %p440 = por %p438, %p439
      %p441 = scmp.ne.s32.totalorder %s430, %s431
      %p442 = scmp.eq.s32.totalorder %s58, 0
      %p443 = por %p441, %p442
      %p444 = scmp.ne.s32.totalorder %s430, %s431
      %p445 = scmp.eq.s32.totalorder %s59, 1
      %p446 = por %p444, %p445
      %p448 = scmp.ne.s32.totalorder %s431, %s447
      %p449 = scmp.eq.s32.totalorder %s59, 0
      %p450 = por %p448, %p449
      %s451 = ssub.s32 %s53, %s60
      %p452 = scmp.eq.s32.totalorder %s451, 0
      %s454 = sadd.s32 %s453, 1
      %s455 = scalar_select %p452, %s453, %s454
      %p458 = pneg %p452
      %p459 = scmp.eq.s32.totalorder %s53, 1
      %p460 = por %p458, %p459
      %p461 = scmp.ne.s32.totalorder %s453, %s456
      %p462 = scmp.eq.s32.totalorder %s53, 0
      %p463 = por %p461, %p462
      %p464 = scmp.ne.s32.totalorder %s453, %s456
      %p465 = scmp.eq.s32.totalorder %s58, 1
      %p466 = por %p464, %p465
      %p467 = scmp.ne.s32.totalorder %s456, %s457
      %p468 = scmp.eq.s32.totalorder %s58, 0
      %p469 = por %p467, %p468
      %p470 = scmp.ne.s32.totalorder %s456, %s457
      %p471 = scmp.eq.s32.totalorder %s59, 1
      %p472 = por %p470, %p471
      %p474 = scmp.ne.s32.totalorder %s457, %s473
      %p475 = scmp.eq.s32.totalorder %s59, 0
      %p476 = por %p474, %p475
      %s477 = ssub.s32 %s53, %s60
      %p478 = scmp.eq.s32.totalorder %s477, 0
      %s480 = sadd.s32 %s479, 1
      %s481 = scalar_select %p478, %s479, %s480
      %p484 = pneg %p478
      %p485 = scmp.eq.s32.totalorder %s53, 1
      %p486 = por %p484, %p485
      %p487 = scmp.ne.s32.totalorder %s479, %s482
      %p488 = scmp.eq.s32.totalorder %s53, 0
      %p489 = por %p487, %p488
      %p490 = scmp.ne.s32.totalorder %s479, %s482
      %p491 = scmp.eq.s32.totalorder %s58, 1
      %p492 = por %p490, %p491
      %p493 = scmp.ne.s32.totalorder %s482, %s483
      %p494 = scmp.eq.s32.totalorder %s58, 0
      %p495 = por %p493, %p494
      %p496 = scmp.ne.s32.totalorder %s482, %s483
      %p497 = scmp.eq.s32.totalorder %s59, 1
      %p498 = por %p496, %p497
      %p500 = scmp.ne.s32.totalorder %s483, %s499
      %p501 = scmp.eq.s32.totalorder %s59, 0
      %p502 = por %p500, %p501
      %s503 = ssub.s32 %s53, %s60
      %p504 = scmp.eq.s32.totalorder %s503, 0
      %s506 = sadd.s32 %s505, 1
      %s507 = scalar_select %p504, %s505, %s506
      %p510 = pneg %p504
      %p511 = scmp.eq.s32.totalorder %s53, 1
      %p512 = por %p510, %p511
      %p513 = scmp.ne.s32.totalorder %s505, %s508
      %p514 = scmp.eq.s32.totalorder %s53, 0
      %p515 = por %p513, %p514
      %p516 = scmp.ne.s32.totalorder %s505, %s508
      %p517 = scmp.eq.s32.totalorder %s58, 1
      %p518 = por %p516, %p517
      %p519 = scmp.ne.s32.totalorder %s508, %s509
      %p520 = scmp.eq.s32.totalorder %s58, 0
      %p521 = por %p519, %p520
      %p522 = scmp.ne.s32.totalorder %s508, %s509
      %p523 = scmp.eq.s32.totalorder %s59, 1
      %p524 = por %p522, %p523
      %p526 = scmp.ne.s32.totalorder %s509, %s525
      %p527 = scmp.eq.s32.totalorder %s59, 0
      %p528 = por %p526, %p527
      %s529 = ssub.s32 %s53, %s60
      %p530 = scmp.eq.s32.totalorder %s529, 0
      %s532 = sadd.s32 %s531, 1
      %s533 = scalar_select %p530, %s531, %s532
      %p536 = pneg %p530
      %p537 = scmp.eq.s32.totalorder %s53, 1
      %p538 = por %p536, %p537
      %p539 = scmp.ne.s32.totalorder %s531, %s534
      %p540 = scmp.eq.s32.totalorder %s53, 0
      %p541 = por %p539, %p540
      %p542 = scmp.ne.s32.totalorder %s531, %s534
      %p543 = scmp.eq.s32.totalorder %s58, 1
      %p544 = por %p542, %p543
      %p545 = scmp.ne.s32.totalorder %s534, %s535
      %p546 = scmp.eq.s32.totalorder %s58, 0
      %p547 = por %p545, %p546
      %p548 = scmp.ne.s32.totalorder %s534, %s535
      %p549 = scmp.eq.s32.totalorder %s59, 1
      %p550 = por %p548, %p549
      %p552 = scmp.ne.s32.totalorder %s535, %s551
      %p553 = scmp.eq.s32.totalorder %s59, 0
      %p554 = por %p552, %p553
      %s555 = ssub.s32 %s53, %s60
      %p556 = scmp.eq.s32.totalorder %s555, 0
      %s558 = sadd.s32 %s557, 1
      %s559 = scalar_select %p556, %s557, %s558
      %p562 = pneg %p556
      %p563 = scmp.eq.s32.totalorder %s53, 1
      %p564 = por %p562, %p563
      %p565 = scmp.ne.s32.totalorder %s557, %s560
      %p566 = scmp.eq.s32.totalorder %s53, 0
      %p567 = por %p565, %p566
      %p568 = scmp.ne.s32.totalorder %s557, %s560
      %p569 = scmp.eq.s32.totalorder %s58, 1
      %p570 = por %p568, %p569
      %p571 = scmp.ne.s32.totalorder %s560, %s561
      %p572 = scmp.eq.s32.totalorder %s58, 0
      %p573 = por %p571, %p572
      %p574 = scmp.ne.s32.totalorder %s560, %s561
      %p575 = scmp.eq.s32.totalorder %s59, 1
      %p576 = por %p574, %p575
      %p578 = scmp.ne.s32.totalorder %s561, %s577
      %p579 = scmp.eq.s32.totalorder %s59, 0
      %p580 = por %p578, %p579
      %s581 = ssub.s32 %s53, %s60
      %p582 = scmp.eq.s32.totalorder %s581, 0
      %s584 = sadd.s32 %s583, 1
      %s585 = scalar_select %p582, %s583, %s584
      %p588 = pneg %p582
      %p589 = scmp.eq.s32.totalorder %s53, 1
      %p590 = por %p588, %p589
      %p591 = scmp.ne.s32.totalorder %s583, %s586
      %p592 = scmp.eq.s32.totalorder %s53, 0
      %p593 = por %p591, %p592
      %p594 = scmp.ne.s32.totalorder %s583, %s586
      %p595 = scmp.eq.s32.totalorder %s58, 1
      %p596 = por %p594, %p595
      %p597 = scmp.ne.s32.totalorder %s586, %s587
      %p598 = scmp.eq.s32.totalorder %s58, 0
      %p599 = por %p597, %p598
      %p600 = scmp.ne.s32.totalorder %s586, %s587
      %p601 = scmp.eq.s32.totalorder %s59, 1
      %p602 = por %p600, %p601
      %p604 = scmp.ne.s32.totalorder %s587, %s603
      %p605 = scmp.eq.s32.totalorder %s59, 0
      %p606 = por %p604, %p605
      %s607 = ssub.s32 %s53, %s60
      %p608 = scmp.eq.s32.totalorder %s607, 0
      %s610 = sadd.s32 %s609, 1
      %s611 = scalar_select %p608, %s609, %s610
      %p614 = pneg %p608
      %p615 = scmp.eq.s32.totalorder %s53, 1
      %p616 = por %p614, %p615
      %p617 = scmp.ne.s32.totalorder %s609, %s612
      %p618 = scmp.eq.s32.totalorder %s53, 0
      %p619 = por %p617, %p618
      %p620 = scmp.ne.s32.totalorder %s609, %s612
      %p621 = scmp.eq.s32.totalorder %s58, 1
      %p622 = por %p620, %p621
      %p623 = scmp.ne.s32.totalorder %s612, %s613
      %p624 = scmp.eq.s32.totalorder %s58, 0
      %p625 = por %p623, %p624
      %p626 = scmp.ne.s32.totalorder %s612, %s613
      %p627 = scmp.eq.s32.totalorder %s59, 1
      %p628 = por %p626, %p627
      %p630 = scmp.ne.s32.totalorder %s613, %s629
      %p631 = scmp.eq.s32.totalorder %s59, 0
      %p632 = por %p630, %p631
      %s633 = ssub.s32 %s53, %s60
      %p634 = scmp.eq.s32.totalorder %s633, 0
      %s636 = sadd.s32 %s635, 1
      %s637 = scalar_select %p634, %s635, %s636
      %p640 = pneg %p634
      %p641 = scmp.eq.s32.totalorder %s53, 1
      %p642 = por %p640, %p641
      %p643 = scmp.ne.s32.totalorder %s635, %s638
      %p644 = scmp.eq.s32.totalorder %s53, 0
      %p645 = por %p643, %p644
      %p646 = scmp.ne.s32.totalorder %s635, %s638
      %p647 = scmp.eq.s32.totalorder %s58, 1
      %p648 = por %p646, %p647
      %p649 = scmp.ne.s32.totalorder %s638, %s639
      %p650 = scmp.eq.s32.totalorder %s58, 0
      %p651 = por %p649, %p650
      %p652 = scmp.ne.s32.totalorder %s638, %s639
      %p653 = scmp.eq.s32.totalorder %s59, 1
      %p654 = por %p652, %p653
      %p656 = scmp.ne.s32.totalorder %s639, %s655
      %p657 = scmp.eq.s32.totalorder %s59, 0
      %p658 = por %p656, %p657
      %p659 = scmp.le.s32.totalorder 1, %s53
      %p660 = scmp.lt.s32.totalorder %s53, 3
      %p661 = pnand %p659, %p660
      %p662 = pneg %p661
      // Predicated region
      $region9: #{tpu_custom_call.1} parent=5 // pred_check
        _
      $region10: #{tpu_custom_call.1} parent=5 // pred_check_branch
        %664 = sbr.rel (%p661) target = $region12
      $region11: #{tpu_custom_call.1} parent=5 // pred_region
        %s665 = ssub.s32 %s53, 1
      $region12: #{tpu_custom_call.1} parent=5 // pred_fallthru
        _
      %p666 = scmp.lt.s32.totalorder %s53, 2
      // Predicated region
      $region13: #{tpu_custom_call.1} parent=5 // pred_check
        %p667 = pneg %p666
      $region14: #{tpu_custom_call.1} parent=5 // pred_check_branch
        %669 = sbr.rel (%p667) target = $region16
      $region15: #{tpu_custom_call.1} parent=5 // pred_region
        // Predicated region
        $region17: #{tpu_custom_call.1} parent=15 // pred_check
          %p670 = pneg %p73
        $region18: #{tpu_custom_call.1} parent=15 // pred_check_branch
          %672 = sbr.rel (%p670) target = $region20
        $region19: #{tpu_custom_call.1} parent=15 // pred_region
          %s673 = sand.u32 %s63, 1
          %s674 = scalar_lea.sflag [#allocation3], %s673
          %s675 = sand.u32 %s63, 1
          %s676 = smul.addr %s675, 8
          %s677 = scalar_lea.vmem [#allocation2], %s676
          %s679 = ssub.s32 128, 128
          %680 = vsyncadd %s674, %s679
          %s681 = smul.addr %s53, 128
          %s682 = scalar_lea.hbm %s0, %s681
          %s684 = sshll.u32 %s677, 4
          %s685 = int_to_ptr.vmem [resolvable:$true] %s684
          %687 = dma.hbm_to_vmem [thread:$0]  %s682, 128, %s685, %s674
        $region20: #{tpu_custom_call.1} parent=15 // pred_fallthru
          _
        // Predicated region
        $region21: #{tpu_custom_call.1} parent=15 // pred_check
          %p688 = pneg %p99
        $region22: #{tpu_custom_call.1} parent=15 // pred_check_branch
          %690 = sbr.rel (%p688) target = $region24
        $region23: #{tpu_custom_call.1} parent=15 // pred_region
          %s691 = sand.u32 %s53, 1
          %s692 = scalar_lea.sflag [#allocation6], %s691
          %s693 = sand.u32 %s89, 1
          %s694 = smul.addr %s693, 8
          %s695 = scalar_lea.vmem [#allocation5], %s694
          %s697 = ssub.s32 128, 128
          %698 = vsyncadd %s692, %s697
          %s699 = smul.addr %s53, 128
          %s700 = scalar_lea.hbm %s1, %s699
          %s702 = sshll.u32 %s695, 4
          %s703 = int_to_ptr.vmem [resolvable:$true] %s702
          %705 = dma.hbm_to_vmem [thread:$0]  %s700, 128, %s703, %s692
        $region24: #{tpu_custom_call.1} parent=15 // pred_fallthru
          _
        // Predicated region
        $region25: #{tpu_custom_call.1} parent=15 // pred_check
          %p706 = pneg %p125
        $region26: #{tpu_custom_call.1} parent=15 // pred_check_branch
          %708 = sbr.rel (%p706) target = $region28
        $region27: #{tpu_custom_call.1} parent=15 // pred_region
          %s709 = sand.u32 %s53, 1
          %s710 = scalar_lea.sflag [#allocation6], %s709
          %s711 = sand.u32 %s115, 1
          %s712 = smul.addr %s711, 8
          %s713 = scalar_lea.vmem [#allocation7], %s712
          %s715 = ssub.s32 128, 128
          %716 = vsyncadd %s710, %s715
          %s717 = smul.addr %s53, 128
          %s718 = scalar_lea.hbm %s2, %s717
          %s720 = sshll.u32 %s713, 4
          %s721 = int_to_ptr.vmem [resolvable:$true] %s720
          %723 = dma.hbm_to_vmem [thread:$0]  %s718, 128, %s721, %s710
        $region28: #{tpu_custom_call.1} parent=15 // pred_fallthru
          _
        // Predicated region
        $region29: #{tpu_custom_call.1} parent=15 // pred_check
          %p724 = pneg %p151
        $region30: #{tpu_custom_call.1} parent=15 // pred_check_branch
          %726 = sbr.rel (%p724) target = $region32
        $region31: #{tpu_custom_call.1} parent=15 // pred_region
          %s727 = sand.u32 %s53, 1
          %s728 = scalar_lea.sflag [#allocation9], %s727
          %s729 = sand.u32 %s141, 1
          %s730 = scalar_lea.vmem [#allocation8], %s729
          %s732 = ssub.s32 16, 16
          %733 = vsyncadd %s728, %s732
          %s734 = smul.addr %s53, 16
          %s735 = scalar_lea.hbm %s3, %s734
          %s737 = sshll.u32 %s730, 4
          %s738 = int_to_ptr.vmem [resolvable:$true] %s737
          %740 = dma.hbm_to_vmem [thread:$0]  %s735, 16, %s738, %s728
        $region32: #{tpu_custom_call.1} parent=15 // pred_fallthru
          _
        // Predicated region
        $region33: #{tpu_custom_call.1} parent=15 // pred_check
          %p741 = pneg %p177
        $region34: #{tpu_custom_call.1} parent=15 // pred_check_branch
          %743 = sbr.rel (%p741) target = $region36
        $region35: #{tpu_custom_call.1} parent=15 // pred_region
          %s744 = sand.u32 %s53, 1
          %s745 = scalar_lea.sflag [#allocation9], %s744
          %s746 = sand.u32 %s167, 1
          %s747 = scalar_lea.vmem [#allocation10], %s746
          %s749 = ssub.s32 16, 16
          %750 = vsyncadd %s745, %s749
          %s751 = smul.addr %s53, 16
          %s752 = scalar_lea.hbm %s4, %s751
          %s754 = sshll.u32 %s747, 4
          %s755 = int_to_ptr.vmem [resolvable:$true] %s754
          %757 = dma.hbm_to_vmem [thread:$0]  %s752, 16, %s755, %s745
        $region36: #{tpu_custom_call.1} parent=15 // pred_fallthru
          _
        // Predicated region
        $region37: #{tpu_custom_call.1} parent=15 // pred_check
          %p758 = pneg %p203
        $region38: #{tpu_custom_call.1} parent=15 // pred_check_branch
          %760 = sbr.rel (%p758) target = $region40
        $region39: #{tpu_custom_call.1} parent=15 // pred_region
          %s761 = sand.u32 %s53, 1
          %s762 = scalar_lea.sflag [#allocation12], %s761
          %s763 = sand.u32 %s193, 1
          %s764 = scalar_lea.vmem [#allocation11], %s763
          %s766 = ssub.s32 16, 16
          %767 = vsyncadd %s762, %s766
          %s768 = smul.addr %s53, 16
          %s769 = scalar_lea.hbm %s5, %s768
          %s771 = sshll.u32 %s764, 4
          %s772 = int_to_ptr.vmem [resolvable:$true] %s771
          %774 = dma.hbm_to_vmem [thread:$0]  %s769, 16, %s772, %s762
        $region40: #{tpu_custom_call.1} parent=15 // pred_fallthru
          _
        // Predicated region
        $region41: #{tpu_custom_call.1} parent=15 // pred_check
          %p775 = pneg %p229
        $region42: #{tpu_custom_call.1} parent=15 // pred_check_branch
          %777 = sbr.rel (%p775) target = $region44
        $region43: #{tpu_custom_call.1} parent=15 // pred_region
          %p778 = scmp.lt.s32.totalorder %s53, 1
          %s779 = scalar_select %p778, %s53, 1
          %s780 = smul.addr %s779, 32
          %s781 = smul.addr %s780, 8
          %s782 = scalar_lea.vmem %s6, %s781
        $region44: #{tpu_custom_call.1} parent=15 // pred_fallthru
          _
        // Predicated region
        $region45: #{tpu_custom_call.1} parent=15 // pred_check
          %p783 = pneg %p255
        $region46: #{tpu_custom_call.1} parent=15 // pred_check_branch
          %785 = sbr.rel (%p783) target = $region48
        $region47: #{tpu_custom_call.1} parent=15 // pred_region
          %s786 = sand.u32 %s53, 1
          %s787 = scalar_lea.sflag [#allocation12], %s786
          %s788 = sand.u32 %s245, 1
          %s789 = smul.addr %s788, 48
          %s790 = scalar_lea.vmem [#allocation13], %s789
          %s792 = ssub.s32 768, 768
          %793 = vsyncadd %s787, %s792
          %s794 = smul.addr %s53, 6
          %s795 = smul.addr %s794, 128
          %s796 = scalar_lea.hbm %s7, %s795
          %s797 = sshll.u32 %s790, 4
          %s798 = int_to_ptr.vmem [resolvable:$true] %s797
          %803 = dma.hbm_to_vmem [thread:$0]  %s796, 768, %s798, %s787, 256, 256, 16
        $region48: #{tpu_custom_call.1} parent=15 // pred_fallthru
          _
        // Predicated region
        $region49: #{tpu_custom_call.1} parent=15 // pred_check
          %p804 = pneg %p281
        $region50: #{tpu_custom_call.1} parent=15 // pred_check_branch
          %806 = sbr.rel (%p804) target = $region52
        $region51: #{tpu_custom_call.1} parent=15 // pred_region
          %s807 = sand.u32 %s53, 1
          %s808 = scalar_lea.sflag [#allocation15], %s807
          %s809 = sand.u32 %s271, 1
          %s810 = smul.addr %s809, 2
          %s811 = scalar_lea.vmem [#allocation14], %s810
          %s813 = ssub.s32 32, 32
          %814 = vsyncadd %s808, %s813
          %s815 = smul.addr %s53, 2
          %s816 = smul.addr %s815, 16
          %s817 = scalar_lea.hbm %s8, %s816
          %s819 = sshll.u32 %s811, 4
          %s820 = int_to_ptr.vmem [resolvable:$true] %s819
          %822 = dma.hbm_to_vmem [thread:$0]  %s817, 32, %s820, %s808
        $region52: #{tpu_custom_call.1} parent=15 // pred_fallthru
          _
        // Predicated region
        $region53: #{tpu_custom_call.1} parent=15 // pred_check
          %p823 = pneg %p307
        $region54: #{tpu_custom_call.1} parent=15 // pred_check_branch
          %825 = sbr.rel (%p823) target = $region56
        $region55: #{tpu_custom_call.1} parent=15 // pred_region
          %p826 = scmp.lt.s32.totalorder %s53, 1
          %s827 = scalar_select %p826, %s53, 1
          %s828 = smul.addr %s827, 32
          %s829 = smul.addr %s828, 8
          %s830 = scalar_lea.vmem %s9, %s829
        $region56: #{tpu_custom_call.1} parent=15 // pred_fallthru
          _
        // Predicated region
        $region57: #{tpu_custom_call.1} parent=15 // pred_check
          %p831 = pneg %p333
        $region58: #{tpu_custom_call.1} parent=15 // pred_check_branch
          %833 = sbr.rel (%p831) target = $region60
        $region59: #{tpu_custom_call.1} parent=15 // pred_region
          %p834 = scmp.lt.s32.totalorder %s53, 1
          %s835 = scalar_select %p834, %s53, 1
          %s836 = scalar_lea.vmem %s10, %s835
        $region60: #{tpu_custom_call.1} parent=15 // pred_fallthru
          _
        // Predicated region
        $region61: #{tpu_custom_call.1} parent=15 // pred_check
          %p837 = pneg %p359
        $region62: #{tpu_custom_call.1} parent=15 // pred_check_branch
          %839 = sbr.rel (%p837) target = $region64
        $region63: #{tpu_custom_call.1} parent=15 // pred_region
          %p840 = scmp.lt.s32.totalorder %s53, 1
          %s841 = scalar_select %p840, %s53, 1
          %s842 = smul.addr %s841, 32
          %s843 = smul.addr %s842, 8
          %s844 = scalar_lea.vmem %s11, %s843
        $region64: #{tpu_custom_call.1} parent=15 // pred_fallthru
          _
        // Predicated region
        $region65: #{tpu_custom_call.1} parent=15 // pred_check
          %p845 = pneg %p385
        $region66: #{tpu_custom_call.1} parent=15 // pred_check_branch
          %847 = sbr.rel (%p845) target = $region68
        $region67: #{tpu_custom_call.1} parent=15 // pred_region
          %p848 = scmp.lt.s32.totalorder %s53, 1
          %s849 = scalar_select %p848, %s53, 1
          %s850 = scalar_lea.vmem %s12, %s849
        $region68: #{tpu_custom_call.1} parent=15 // pred_fallthru
          _
        // Predicated region
        $region69: #{tpu_custom_call.1} parent=15 // pred_check
          %p851 = pneg %p411
        $region70: #{tpu_custom_call.1} parent=15 // pred_check_branch
          %853 = sbr.rel (%p851) target = $region72
        $region71: #{tpu_custom_call.1} parent=15 // pred_region
          %p854 = scmp.lt.s32.totalorder %s53, 1
          %s855 = scalar_select %p854, %s53, 1
          %s856 = smul.addr %s855, 16
          %s857 = smul.addr %s856, 8
          %s858 = scalar_lea.vmem %s13, %s857
        $region72: #{tpu_custom_call.1} parent=15 // pred_fallthru
          _
        // Predicated region
        $region73: #{tpu_custom_call.1} parent=15 // pred_check
          %p859 = pneg %p437
        $region74: #{tpu_custom_call.1} parent=15 // pred_check_branch
          %861 = sbr.rel (%p859) target = $region76
        $region75: #{tpu_custom_call.1} parent=15 // pred_region
          %s862 = sand.u32 %s53, 1
          %s863 = scalar_lea.sflag [#allocation15], %s862
          %s864 = sand.u32 %s427, 1
          %s865 = smul.addr %s864, 48
          %s866 = scalar_lea.vmem [#allocation16], %s865
          %s868 = ssub.s32 768, 768
          %869 = vsyncadd %s863, %s868
          %s870 = smul.addr %s53, 6
          %s871 = smul.addr %s870, 128
          %s872 = scalar_lea.hbm %s14, %s871
          %s873 = sshll.u32 %s866, 4
          %s874 = int_to_ptr.vmem [resolvable:$true] %s873
          %879 = dma.hbm_to_vmem [thread:$0]  %s872, 768, %s874, %s863, 256, 256, 16
        $region76: #{tpu_custom_call.1} parent=15 // pred_fallthru
          _
        // Predicated region
        $region77: #{tpu_custom_call.1} parent=15 // pred_check
          %p880 = pneg %p463
        $region78: #{tpu_custom_call.1} parent=15 // pred_check_branch
          %882 = sbr.rel (%p880) target = $region80
        $region79: #{tpu_custom_call.1} parent=15 // pred_region
          %p883 = scmp.lt.s32.totalorder %s53, 1
          %s884 = scalar_select %p883, %s53, 1
          %s885 = smul.addr %s884, 2
          %s886 = scalar_lea.vmem %s15, %s885
        $region80: #{tpu_custom_call.1} parent=15 // pred_fallthru
          _
        // Predicated region
        $region81: #{tpu_custom_call.1} parent=15 // pred_check
          %p887 = pneg %p489
        $region82: #{tpu_custom_call.1} parent=15 // pred_check_branch
          %889 = sbr.rel (%p887) target = $region84
        $region83: #{tpu_custom_call.1} parent=15 // pred_region
          %p890 = scmp.lt.s32.totalorder %s53, 1
          %s891 = scalar_select %p890, %s53, 1
          %s892 = smul.addr %s891, 32
          %s893 = smul.addr %s892, 8
          %s894 = scalar_lea.vmem %s16, %s893
        $region84: #{tpu_custom_call.1} parent=15 // pred_fallthru
          _
        // Predicated region
        $region85: #{tpu_custom_call.1} parent=15 // pred_check
          %p895 = pneg %p515
        $region86: #{tpu_custom_call.1} parent=15 // pred_check_branch
          %897 = sbr.rel (%p895) target = $region88
        $region87: #{tpu_custom_call.1} parent=15 // pred_region
          %p898 = scmp.lt.s32.totalorder %s53, 1
          %s899 = scalar_select %p898, %s53, 1
          %s900 = scalar_lea.vmem %s17, %s899
        $region88: #{tpu_custom_call.1} parent=15 // pred_fallthru
          _
      $region16: #{tpu_custom_call.1} parent=5 // pred_fallthru
        _
      %p901 = scmp.le.s32.totalorder 1, %s53
      %p902 = scmp.lt.s32.totalorder %s53, 3
      %p903 = pnand %p901, %p902
      %p904 = pneg %p903
      // Predicated region
      $region89: #{tpu_custom_call.1} parent=5 // pred_check
        _
      $region90: #{tpu_custom_call.1} parent=5 // pred_check_branch
        %906 = sbr.rel (%p903) target = $region92
      $region91: #{tpu_custom_call.1} parent=5 // pred_region
        %s907 = ssub.s32 %s53, 1
        %s908 = sand.u32 %s66, 1
        %s909 = scalar_lea.sflag [#allocation3], %s908
        %s910 = sand.u32 %s66, 1
        %s911 = smul.addr %s910, 8
        %s912 = scalar_lea.vmem [#allocation2], %s911
        // Predicated region
        $region93: #{tpu_custom_call.1} parent=91 // pred_check
          %p913 = pneg %p79
        $region94: #{tpu_custom_call.1} parent=91 // pred_check_branch
          %915 = sbr.rel (%p913) target = $region96
        $region95: #{tpu_custom_call.1} parent=91 // pred_region
          %916 = dma.done %s909, 128
        $region96: #{tpu_custom_call.1} parent=91 // pred_fallthru
          _
        %s917 = sand.u32 %s58, 1
        %s918 = scalar_lea.sflag [#allocation6], %s917
        %s919 = sand.u32 %s92, 1
        %s920 = smul.addr %s919, 8
        %s921 = scalar_lea.vmem [#allocation5], %s920
        // Predicated region
        $region97: #{tpu_custom_call.1} parent=91 // pred_check
          %p922 = pneg %p105
        $region98: #{tpu_custom_call.1} parent=91 // pred_check_branch
          %924 = sbr.rel (%p922) target = $region100
        $region99: #{tpu_custom_call.1} parent=91 // pred_region
          %925 = dma.done %s918, 128
        $region100: #{tpu_custom_call.1} parent=91 // pred_fallthru
          _
        %s926 = sand.u32 %s58, 1
        %s927 = scalar_lea.sflag [#allocation6], %s926
        %s928 = sand.u32 %s118, 1
        %s929 = smul.addr %s928, 8
        %s930 = scalar_lea.vmem [#allocation7], %s929
        // Predicated region
        $region101: #{tpu_custom_call.1} parent=91 // pred_check
          %p931 = pneg %p131
        $region102: #{tpu_custom_call.1} parent=91 // pred_check_branch
          %933 = sbr.rel (%p931) target = $region104
        $region103: #{tpu_custom_call.1} parent=91 // pred_region
          %934 = dma.done %s927, 128
        $region104: #{tpu_custom_call.1} parent=91 // pred_fallthru
          _
        %s935 = sand.u32 %s58, 1
        %s936 = scalar_lea.sflag [#allocation9], %s935
        %s937 = sand.u32 %s144, 1
        %s938 = scalar_lea.vmem [#allocation8], %s937
        // Predicated region
        $region105: #{tpu_custom_call.1} parent=91 // pred_check
          %p939 = pneg %p157
        $region106: #{tpu_custom_call.1} parent=91 // pred_check_branch
          %941 = sbr.rel (%p939) target = $region108
        $region107: #{tpu_custom_call.1} parent=91 // pred_region
          %942 = dma.done %s936, 16
        $region108: #{tpu_custom_call.1} parent=91 // pred_fallthru
          _
        %s943 = sand.u32 %s58, 1
        %s944 = scalar_lea.sflag [#allocation9], %s943
        %s945 = sand.u32 %s170, 1
        %s946 = scalar_lea.vmem [#allocation10], %s945
        // Predicated region
        $region109: #{tpu_custom_call.1} parent=91 // pred_check
          %p947 = pneg %p183
        $region110: #{tpu_custom_call.1} parent=91 // pred_check_branch
          %949 = sbr.rel (%p947) target = $region112
        $region111: #{tpu_custom_call.1} parent=91 // pred_region
          %950 = dma.done %s944, 16
        $region112: #{tpu_custom_call.1} parent=91 // pred_fallthru
          _
        %s951 = sand.u32 %s58, 1
        %s952 = scalar_lea.sflag [#allocation12], %s951
        %s953 = sand.u32 %s196, 1
        %s954 = scalar_lea.vmem [#allocation11], %s953
        // Predicated region
        $region113: #{tpu_custom_call.1} parent=91 // pred_check
          %p955 = pneg %p209
        $region114: #{tpu_custom_call.1} parent=91 // pred_check_branch
          %957 = sbr.rel (%p955) target = $region116
        $region115: #{tpu_custom_call.1} parent=91 // pred_region
          %958 = dma.done %s952, 16
        $region116: #{tpu_custom_call.1} parent=91 // pred_fallthru
          _
        %s959 = sand.u32 %s58, 1
        %s960 = scalar_lea.sflag [#allocation12], %s959
        %s961 = sand.u32 %s248, 1
        %s962 = smul.addr %s961, 48
        %s963 = scalar_lea.vmem [#allocation13], %s962
        // Predicated region
        $region117: #{tpu_custom_call.1} parent=91 // pred_check
          %p964 = pneg %p261
        $region118: #{tpu_custom_call.1} parent=91 // pred_check_branch
          %966 = sbr.rel (%p964) target = $region120
        $region119: #{tpu_custom_call.1} parent=91 // pred_region
          %967 = dma.done %s960, 768
        $region120: #{tpu_custom_call.1} parent=91 // pred_fallthru
          _
        %s968 = sand.u32 %s58, 1
        %s969 = scalar_lea.sflag [#allocation15], %s968
        %s970 = sand.u32 %s274, 1
        %s971 = smul.addr %s970, 2
        %s972 = scalar_lea.vmem [#allocation14], %s971
        // Predicated region
        $region121: #{tpu_custom_call.1} parent=91 // pred_check
          %p973 = pneg %p287
        $region122: #{tpu_custom_call.1} parent=91 // pred_check_branch
          %975 = sbr.rel (%p973) target = $region124
        $region123: #{tpu_custom_call.1} parent=91 // pred_region
          %976 = dma.done %s969, 32
        $region124: #{tpu_custom_call.1} parent=91 // pred_fallthru
          _
        %s977 = sand.u32 %s58, 1
        %s978 = scalar_lea.sflag [#allocation15], %s977
        %s979 = sand.u32 %s430, 1
        %s980 = smul.addr %s979, 48
        %s981 = scalar_lea.vmem [#allocation16], %s980
        // Predicated region
        $region125: #{tpu_custom_call.1} parent=91 // pred_check
          %p982 = pneg %p443
        $region126: #{tpu_custom_call.1} parent=91 // pred_check_branch
          %984 = sbr.rel (%p982) target = $region128
        $region127: #{tpu_custom_call.1} parent=91 // pred_region
          %985 = dma.done %s978, 768
        $region128: #{tpu_custom_call.1} parent=91 // pred_fallthru
          _
        %s986 = sand.u32 %s66, 1
        %s987 = scalar_lea.sflag [#allocation3], %s986
        %s988 = sand.u32 %s66, 1
        %s989 = smul.addr %s988, 8
        %s990 = scalar_lea.vmem [#allocation2], %s989
        %p991 = pneg %p79
        %p992 = pneg %p76
        %s993 = sand.u32 %s58, 1
        %s994 = scalar_lea.sflag [#allocation6], %s993
        %s995 = sand.u32 %s92, 1
        %s996 = smul.addr %s995, 8
        %s997 = scalar_lea.vmem [#allocation5], %s996
        %p998 = pneg %p105
        %p999 = pneg %p102
        %s1000 = sand.u32 %s58, 1
        %s1001 = scalar_lea.sflag [#allocation6], %s1000
        %s1002 = sand.u32 %s118, 1
        %s1003 = smul.addr %s1002, 8
        %s1004 = scalar_lea.vmem [#allocation7], %s1003
        %p1005 = pneg %p131
        %p1006 = pneg %p128
        %s1007 = sand.u32 %s58, 1
        %s1008 = scalar_lea.sflag [#allocation9], %s1007
        %s1009 = sand.u32 %s144, 1
        %s1010 = scalar_lea.vmem [#allocation8], %s1009
        %p1011 = pneg %p157
        %p1012 = pneg %p154
        %s1013 = sand.u32 %s58, 1
        %s1014 = scalar_lea.sflag [#allocation9], %s1013
        %s1015 = sand.u32 %s170, 1
        %s1016 = scalar_lea.vmem [#allocation10], %s1015
        %p1017 = pneg %p183
        %p1018 = pneg %p180
        %s1019 = sand.u32 %s58, 1
        %s1020 = scalar_lea.sflag [#allocation12], %s1019
        %s1021 = sand.u32 %s196, 1
        %s1022 = scalar_lea.vmem [#allocation11], %s1021
        %p1023 = pneg %p209
        %p1024 = pneg %p206
        %p1025 = scmp.lt.s32.totalorder %s58, 1
        %s1026 = scalar_select %p1025, %s58, 1
        %s1027 = smul.addr %s1026, 32
        %s1028 = smul.addr %s1027, 8
        %s1029 = scalar_lea.vmem %s6, %s1028
        %p1030 = pneg %p235
        %p1031 = pneg %p232
        %s1032 = sand.u32 %s58, 1
        %s1033 = scalar_lea.sflag [#allocation12], %s1032
        %s1034 = sand.u32 %s248, 1
        %s1035 = smul.addr %s1034, 48
        %s1036 = scalar_lea.vmem [#allocation13], %s1035
        %p1037 = pneg %p261
        %p1038 = pneg %p258
        %s1039 = sand.u32 %s58, 1
        %s1040 = scalar_lea.sflag [#allocation15], %s1039
        %s1041 = sand.u32 %s274, 1
        %s1042 = smul.addr %s1041, 2
        %s1043 = scalar_lea.vmem [#allocation14], %s1042
        %p1044 = pneg %p287
        %p1045 = pneg %p284
        %p1046 = scmp.lt.s32.totalorder %s58, 1
        %s1047 = scalar_select %p1046, %s58, 1
        %s1048 = smul.addr %s1047, 32
        %s1049 = smul.addr %s1048, 8
        %s1050 = scalar_lea.vmem %s9, %s1049
        %p1051 = pneg %p313
        %p1052 = pneg %p310
        %p1053 = scmp.lt.s32.totalorder %s58, 1
        %s1054 = scalar_select %p1053, %s58, 1
        %s1055 = scalar_lea.vmem %s10, %s1054
        %p1056 = pneg %p339
        %p1057 = pneg %p336
        %p1058 = scmp.lt.s32.totalorder %s58, 1
        %s1059 = scalar_select %p1058, %s58, 1
        %s1060 = smul.addr %s1059, 32
        %s1061 = smul.addr %s1060, 8
        %s1062 = scalar_lea.vmem %s11, %s1061
        %p1063 = pneg %p365
        %p1064 = pneg %p362
        %p1065 = scmp.lt.s32.totalorder %s58, 1
        %s1066 = scalar_select %p1065, %s58, 1
        %s1067 = scalar_lea.vmem %s12, %s1066
        %p1068 = pneg %p391
        %p1069 = pneg %p388
        %p1070 = scmp.lt.s32.totalorder %s58, 1
        %s1071 = scalar_select %p1070, %s58, 1
        %s1072 = smul.addr %s1071, 16
        %s1073 = smul.addr %s1072, 8
        %s1074 = scalar_lea.vmem %s13, %s1073
        %p1075 = pneg %p417
        %p1076 = pneg %p414
        %s1077 = sand.u32 %s58, 1
        %s1078 = scalar_lea.sflag [#allocation15], %s1077
        %s1079 = sand.u32 %s430, 1
        %s1080 = smul.addr %s1079, 48
        %s1081 = scalar_lea.vmem [#allocation16], %s1080
        %p1082 = pneg %p443
        %p1083 = pneg %p440
        %p1084 = scmp.lt.s32.totalorder %s58, 1
        %s1085 = scalar_select %p1084, %s58, 1
        %s1086 = smul.addr %s1085, 2
        %s1087 = scalar_lea.vmem %s15, %s1086
        %p1088 = pneg %p469
        %p1089 = pneg %p466
        %p1090 = scmp.lt.s32.totalorder %s58, 1
        %s1091 = scalar_select %p1090, %s58, 1
        %s1092 = smul.addr %s1091, 32
        %s1093 = smul.addr %s1092, 8
        %s1094 = scalar_lea.vmem %s16, %s1093
        %p1095 = pneg %p495
        %p1096 = pneg %p492
        %p1097 = scmp.lt.s32.totalorder %s58, 1
        %s1098 = scalar_select %p1097, %s58, 1
        %s1099 = scalar_lea.vmem %s17, %s1098
        %p1100 = pneg %p521
        %p1101 = pneg %p518
        %p1102 = pneg %p547
        %p1103 = pneg %p544
        %s1104 = sand.u32 %s534, 1
        %s1105 = scalar_lea.sflag [#allocation4], %s1104
        %s1106 = sand.u32 %s534, 1
        %s1107 = smul.addr %s1106, 8
        %s1108 = scalar_lea.vmem [#allocation17], %s1107
        %p1109 = pneg %p573
        %p1110 = pneg %p570
        %s1111 = sand.u32 %s58, 1
        %s1112 = scalar_lea.sflag [#allocation19], %s1111
        %s1113 = sand.u32 %s560, 1
        %s1114 = smul.addr %s1113, 8
        %s1115 = scalar_lea.vmem [#allocation18], %s1114
        %p1116 = pneg %p599
        %p1117 = pneg %p596
        %s1118 = sand.u32 %s58, 1
        %s1119 = scalar_lea.sflag [#allocation19], %s1118
        %s1120 = sand.u32 %s586, 1
        %s1121 = smul.addr %s1120, 8
        %s1122 = scalar_lea.vmem [#allocation20], %s1121
        %p1123 = pneg %p625
        %p1124 = pneg %p622
        %s1125 = sand.u32 %s58, 1
        %s1126 = scalar_lea.sflag [#allocation22], %s1125
        %s1127 = sand.u32 %s612, 1
        %s1128 = smul.addr %s1127, 8
        %s1129 = scalar_lea.vmem [#allocation21], %s1128
        %p1130 = pneg %p651
        %p1131 = pneg %p648
        %s1132 = sand.u32 %s58, 1
        %s1133 = scalar_lea.sflag [#allocation22], %s1132
        %s1134 = sand.u32 %s638, 1
        %s1135 = smul.addr %s1134, 8
        %s1136 = scalar_lea.vmem [#allocation23], %s1135
        %p1137 = scmp.lt.s32.totalorder %s58, 1
        %s1138 = scalar_select %p1137, %s58, 1
        %s1139 = smul.addr %s1138, 32
        %s1140 = smul.addr %s1139, 8
        %s1141 = scalar_lea.vmem %s6, %s1140
        %p1142 = scmp.lt.s32.totalorder %s58, 1
        %s1143 = scalar_select %p1142, %s58, 1
        %s1144 = smul.addr %s1143, 32
        %s1145 = smul.addr %s1144, 8
        %s1146 = scalar_lea.vmem %s9, %s1145
        %p1147 = scmp.lt.s32.totalorder %s58, 1
        %s1148 = scalar_select %p1147, %s58, 1
        %s1149 = scalar_lea.vmem %s10, %s1148
        %p1150 = scmp.lt.s32.totalorder %s58, 1
        %s1151 = scalar_select %p1150, %s58, 1
        %s1152 = smul.addr %s1151, 32
        %s1153 = smul.addr %s1152, 8
        %s1154 = scalar_lea.vmem %s11, %s1153
        %p1155 = scmp.lt.s32.totalorder %s58, 1
        %s1156 = scalar_select %p1155, %s58, 1
        %s1157 = scalar_lea.vmem %s12, %s1156
        %p1158 = scmp.lt.s32.totalorder %s58, 1
        %s1159 = scalar_select %p1158, %s58, 1
        %s1160 = smul.addr %s1159, 16
        %s1161 = smul.addr %s1160, 8
        %s1162 = scalar_lea.vmem %s13, %s1161
        %p1163 = scmp.lt.s32.totalorder %s58, 1
        %s1164 = scalar_select %p1163, %s58, 1
        %s1165 = smul.addr %s1164, 2
        %s1166 = scalar_lea.vmem %s15, %s1165
        %p1167 = scmp.lt.s32.totalorder %s58, 1
        %s1168 = scalar_select %p1167, %s58, 1
        %s1169 = smul.addr %s1168, 32
        %s1170 = smul.addr %s1169, 8
        %s1171 = scalar_lea.vmem %s16, %s1170
        %p1172 = scmp.lt.s32.totalorder %s58, 1
        %s1173 = scalar_select %p1172, %s58, 1
        %s1174 = scalar_lea.vmem %s17, %s1173
        %v1175 = vld [vmem:[%s912] sm:$0xff]
        %v1176 = vld [vmem:[%s921] sm:$0xff]
        %v1177 = vld [vmem:[%s930] sm:$0xff]
        %v1178 = vld [vmem:[%s938] sm:$0x1]
        %v1179 = vld [vmem:[%s946] sm:$0x1]
        %v1180 = vld [vmem:[%s954] sm:$0x1]
        %v1182 = vlaneseq
        %v1183 = vshrl.u32 %v1182, 7
        %v1184 = vsub.s32 0, %v1183
        %v1185 = vrot.slane %v1178, %v1184
        %v1187 = vsub.f32 %v1175, %v1185
        %v1189 = vlaneseq
        %v1190 = vshrl.u32 %v1189, 7
        %v1191 = vsub.s32 0, %v1190
        %v1192 = vrot.slane %v1180, %v1191
        %v1194 = vmul.f32 %v1187, %v1192
        %v1195 = vld [vmem:[%s1141] sm:$0xff]
        %v1196 = vld [vmem:[%s1141 + $0x8] sm:$0xff]
        %v1197 = vld [vmem:[%s1141 + $0x10] sm:$0xff]
        %v1198 = vld [vmem:[%s1141 + $0x18] sm:$0xff]
        %v1199 = vld [vmem:[%s1141 + $0x20] sm:$0xff]
        %v1200 = vld [vmem:[%s1141 + $0x28] sm:$0xff]
        %v1201 = vld [vmem:[%s1141 + $0x30] sm:$0xff]
        %v1202 = vld [vmem:[%s1141 + $0x38] sm:$0xff]
        %v1203 = vld [vmem:[%s1141 + $0x40] sm:$0xff]
        %v1204 = vld [vmem:[%s1141 + $0x48] sm:$0xff]
        %v1205 = vld [vmem:[%s1141 + $0x50] sm:$0xff]
        %v1206 = vld [vmem:[%s1141 + $0x58] sm:$0xff]
        %v1207 = vld [vmem:[%s1141 + $0x60] sm:$0xff]
        %v1208 = vld [vmem:[%s1141 + $0x68] sm:$0xff]
        %v1209 = vld [vmem:[%s1141 + $0x70] sm:$0xff]
        %v1210 = vld [vmem:[%s1141 + $0x78] sm:$0xff]
        %v1211 = vld [vmem:[%s1141 + $0x80] sm:$0xff]
        %v1212 = vld [vmem:[%s1141 + $0x88] sm:$0xff]
        %v1213 = vld [vmem:[%s1141 + $0x90] sm:$0xff]
        %v1214 = vld [vmem:[%s1141 + $0x98] sm:$0xff]
        %v1215 = vld [vmem:[%s1141 + $0xa0] sm:$0xff]
        %v1216 = vld [vmem:[%s1141 + $0xa8] sm:$0xff]
        %v1217 = vld [vmem:[%s1141 + $0xb0] sm:$0xff]
        %v1218 = vld [vmem:[%s1141 + $0xb8] sm:$0xff]
        %v1219 = vld [vmem:[%s1141 + $0xc0] sm:$0xff]
        %v1220 = vld [vmem:[%s1141 + $0xc8] sm:$0xff]
        %v1221 = vld [vmem:[%s1141 + $0xd0] sm:$0xff]
        %v1222 = vld [vmem:[%s1141 + $0xd8] sm:$0xff]
        %v1223 = vld [vmem:[%s1141 + $0xe0] sm:$0xff]
        %v1224 = vld [vmem:[%s1141 + $0xe8] sm:$0xff]
        %v1225 = vld [vmem:[%s1141 + $0xf0] sm:$0xff]
        %v1226 = vld [vmem:[%s1141 + $0xf8] sm:$0xff]
        %v1227 = vld [vmem:[%s963] sm:$0xff]
        %v1228 = vld [vmem:[%s963 + $0x8] sm:$0xff]
        %v1229 = vld [vmem:[%s963 + $0x10] sm:$0xff]
        %v1230 = vld [vmem:[%s963 + $0x18] sm:$0xff]
        %v1231 = vld [vmem:[%s963 + $0x20] sm:$0xff]
        %v1232 = vld [vmem:[%s963 + $0x28] sm:$0xff]
        %vm1233 = vcmask 195584
        %v1235 = vsel %vm1233, %v1176, 0
        %1237 = vmatprep.subr.mxu0 0.0
        %1238 = vmatpush1.msra.mxu0 0.0
        %1239 = vmatprep.subr.mxu0 0.0
        %1240 = vmatpush1.msra.mxu0 0.0
        %1241 = vmatprep.subr.mxu0 0.0
        %1242 = vmatpush1.msra.mxu0 0.0
        %1243 = vmatprep.subr.mxu0 0.0
        %1244 = vmatpush1.msra.mxu0 0.0
        %1245 = vmatprep.subr.mxu0 0.0
        %1246 = vmatpush1.msra.mxu0 0.0
        %1247 = vmatprep.subr.mxu0 0.0
        %1248 = vmatpush1.msra.mxu0 0.0
        %1249 = vmatprep.subr.mxu0 0.0
        %1250 = vmatpush1.msra.mxu0 0.0
        %1251 = vmatprep.subr.mxu0 0.0
        %1252 = vmatpush1.msra.mxu0 0.0
        %1253 = vmatprep.subr.mxu0 0.0
        %1254 = vmatpush1.msra.mxu0 0.0
        %1255 = vmatprep.subr.mxu0 0.0
        %1256 = vmatpush1.msra.mxu0 0.0
        %1257 = vmatprep.subr.mxu0 0.0
        %1258 = vmatpush1.msra.mxu0 0.0
        %1259 = vmatprep.subr.mxu0 0.0
        %1260 = vmatpush1.msra.mxu0 0.0
        %1261 = vmatprep.subr.mxu0 0.0
        %1262 = vmatpush1.msra.mxu0 0.0
        %1263 = vmatprep.subr.mxu0 %v1232
        %1264 = vmatpush1.msra.mxu0 %v1231
        %1265 = vmatprep.subr.mxu0 %v1230
        %1266 = vmatpush1.msra.mxu0 %v1229
        %1267 = vmatprep.subr.mxu0 %v1228
        %1268 = vmatpush1.msra.mxu0 %v1227
        %1269 = vmatprep.subr.mxu0 0.0
        %1270 = vmatpush2.msra.mxu0 0.0
        %1271 = vmatprep.subr.mxu0 0.0
        %1272 = vmatpush2.msra.mxu0 0.0
        %1273 = vmatprep.subr.mxu0 0.0
        %1274 = vmatpush2.msra.mxu0 0.0
        %1275 = vmatprep.subr.mxu0 0.0
        %1276 = vmatpush2.msra.mxu0 0.0
        %1277 = vmatprep.subr.mxu0 0.0
        %1278 = vmatpush2.msra.mxu0 0.0
        %1279 = vmatprep.subr.mxu0 0.0
        %1280 = vmatpush2.msra.mxu0 0.0
        %1281 = vmatprep.subr.mxu0 0.0
        %1282 = vmatpush2.msra.mxu0 0.0
        %1283 = vmatprep.subr.mxu0 0.0
        %1284 = vmatpush2.msra.mxu0 0.0
        %1285 = vmatprep.subr.mxu0 0.0
        %1286 = vmatpush2.msra.mxu0 0.0
        %1287 = vmatprep.subr.mxu0 0.0
        %1288 = vmatpush2.msra.mxu0 0.0
        %1289 = vmatprep.subr.mxu0 0.0
        %1290 = vmatpush2.msra.mxu0 0.0
        %1291 = vmatprep.subr.mxu0 0.0
        %1292 = vmatpush2.msra.mxu0 0.0
        %1293 = vmatprep.subr.mxu0 0.0
        %1294 = vmatpush2.msra.mxu0 0.0
        %1295 = vmatprep.subr.mxu0 0.0
        %1296 = vmatpush2.msra.mxu0 0.0
        %1297 = vmatprep.subr.mxu0 0.0
        %1298 = vmatpush2.msra.mxu0 0.0
        %1299 = vmatprep.subr.mxu0 0.0
        %1300 = vmatpush2.msra.mxu0 0.0
        %1301 = vmatprep.mubr.f32.mxu0 0.0
        %1302 = vmatmul.mubr.f32.gmra.mxu0 %v1235
        %v1303 = vpop.f32.mrf.mxu0
        %v1304 = vadd.f32 0.0, %v1303
        %v1305 = vpop.f32.mrf.mxu0
        %v1306 = vadd.f32 0.0, %v1305
        %1307 = vdwg.mxu0
        %1308 = vmatprep.subr.mxu0 %v1226
        %1309 = vmatpush1.msra.mxu0 %v1225
        %1310 = vmatprep.subr.mxu0 %v1224
        %1311 = vmatpush1.msra.mxu0 %v1223
        %1312 = vmatprep.subr.mxu0 %v1222
        %1313 = vmatpush1.msra.mxu0 %v1221
        %1314 = vmatprep.subr.mxu0 %v1220
        %1315 = vmatpush1.msra.mxu0 %v1219
        %1316 = vmatprep.subr.mxu0 %v1218
        %1317 = vmatpush1.msra.mxu0 %v1217
        %1318 = vmatprep.subr.mxu0 %v1216
        %1319 = vmatpush1.msra.mxu0 %v1215
        %1320 = vmatprep.subr.mxu0 %v1214
        %1321 = vmatpush1.msra.mxu0 %v1213
        %1322 = vmatprep.subr.mxu0 %v1212
        %1323 = vmatpush1.msra.mxu0 %v1211
        %1324 = vmatprep.subr.mxu0 %v1210
        %1325 = vmatpush1.msra.mxu0 %v1209
        %1326 = vmatprep.subr.mxu0 %v1208
        %1327 = vmatpush1.msra.mxu0 %v1207
        %1328 = vmatprep.subr.mxu0 %v1206
        %1329 = vmatpush1.msra.mxu0 %v1205
        %1330 = vmatprep.subr.mxu0 %v1204
        %1331 = vmatpush1.msra.mxu0 %v1203
        %1332 = vmatprep.subr.mxu0 %v1202
        %1333 = vmatpush1.msra.mxu0 %v1201
        %1334 = vmatprep.subr.mxu0 %v1200
        %1335 = vmatpush1.msra.mxu0 %v1199
        %1336 = vmatprep.subr.mxu0 %v1198
        %1337 = vmatpush1.msra.mxu0 %v1197
        %1338 = vmatprep.subr.mxu0 %v1196
        %1339 = vmatpush1.msra.mxu0 %v1195
        %1340 = vmatprep.subr.mxu0 0.0
        %1341 = vmatpush2.msra.mxu0 0.0
        %1342 = vmatprep.subr.mxu0 0.0
        %1343 = vmatpush2.msra.mxu0 0.0
        %1344 = vmatprep.subr.mxu0 0.0
        %1345 = vmatpush2.msra.mxu0 0.0
        %1346 = vmatprep.subr.mxu0 0.0
        %1347 = vmatpush2.msra.mxu0 0.0
        %1348 = vmatprep.subr.mxu0 0.0
        %1349 = vmatpush2.msra.mxu0 0.0
        %1350 = vmatprep.subr.mxu0 0.0
        %1351 = vmatpush2.msra.mxu0 0.0
        %1352 = vmatprep.subr.mxu0 0.0
        %1353 = vmatpush2.msra.mxu0 0.0
        %1354 = vmatprep.subr.mxu0 0.0
        %1355 = vmatpush2.msra.mxu0 0.0
        %1356 = vmatprep.subr.mxu0 0.0
        %1357 = vmatpush2.msra.mxu0 0.0
        %1358 = vmatprep.subr.mxu0 0.0
        %1359 = vmatpush2.msra.mxu0 0.0
        %1360 = vmatprep.subr.mxu0 0.0
        %1361 = vmatpush2.msra.mxu0 0.0
        %1362 = vmatprep.subr.mxu0 0.0
        %1363 = vmatpush2.msra.mxu0 0.0
        %1364 = vmatprep.subr.mxu0 0.0
        %1365 = vmatpush2.msra.mxu0 0.0
        %1366 = vmatprep.subr.mxu0 0.0
        %1367 = vmatpush2.msra.mxu0 0.0
        %1368 = vmatprep.subr.mxu0 0.0
        %1369 = vmatpush2.msra.mxu0 0.0
        %1370 = vmatprep.subr.mxu0 0.0
        %1371 = vmatpush2.msra.mxu0 0.0
        %1372 = vmatprep.mubr.f32.mxu0 0.0
        %1373 = vmatmul.mubr.f32.gmra.mxu0 %v1194
        %v1374 = vpop.f32.mrf.mxu0
        %v1375 = vadd.f32 %v1304, %v1374
        %v1376 = vpop.f32.mrf.mxu0
        %v1377 = vadd.f32 %v1306, %v1376
        %1378 = vdwg.mxu0
        %v1379 = vld [vmem:[%s972] sm:$0x3]
        %v1381 = vlaneseq
        %v1382 = vshrl.u32 %v1381, 7
        %v1383 = vsub.s32 0, %v1382
        %v1384 = vrot.slane %v1379, %v1383
        %v1385 = vlaneseq
        %v1386 = vshrl.u32 %v1385, 7
        %v1387 = vsub.s32 1, %v1386
        %v1388 = vrot.slane %v1379, %v1387
        %v1391 = vadd.f32 %v1375, %v1384
        %v1392 = vadd.f32 %v1377, %v1388
        %v1393 = vmax.f32 %v1391, 0.0
        %v1394 = vmax.f32 %v1392, 0.0
        %v1395 = vld [vmem:[%s1146] sm:$0xff]
        %v1396 = vld [vmem:[%s1146 + $0x8] sm:$0xff]
        %v1397 = vld [vmem:[%s1146 + $0x10] sm:$0xff]
        %v1398 = vld [vmem:[%s1146 + $0x18] sm:$0xff]
        %v1399 = vld [vmem:[%s1146 + $0x20] sm:$0xff]
        %v1400 = vld [vmem:[%s1146 + $0x28] sm:$0xff]
        %v1401 = vld [vmem:[%s1146 + $0x30] sm:$0xff]
        %v1402 = vld [vmem:[%s1146 + $0x38] sm:$0xff]
        %v1403 = vld [vmem:[%s1146 + $0x40] sm:$0xff]
        %v1404 = vld [vmem:[%s1146 + $0x48] sm:$0xff]
        %v1405 = vld [vmem:[%s1146 + $0x50] sm:$0xff]
        %v1406 = vld [vmem:[%s1146 + $0x58] sm:$0xff]
        %v1407 = vld [vmem:[%s1146 + $0x60] sm:$0xff]
        %v1408 = vld [vmem:[%s1146 + $0x68] sm:$0xff]
        %v1409 = vld [vmem:[%s1146 + $0x70] sm:$0xff]
        %v1410 = vld [vmem:[%s1146 + $0x78] sm:$0xff]
        %v1411 = vld [vmem:[%s1146 + $0x80] sm:$0xff]
        %v1412 = vld [vmem:[%s1146 + $0x88] sm:$0xff]
        %v1413 = vld [vmem:[%s1146 + $0x90] sm:$0xff]
        %v1414 = vld [vmem:[%s1146 + $0x98] sm:$0xff]
        %v1415 = vld [vmem:[%s1146 + $0xa0] sm:$0xff]
        %v1416 = vld [vmem:[%s1146 + $0xa8] sm:$0xff]
        %v1417 = vld [vmem:[%s1146 + $0xb0] sm:$0xff]
        %v1418 = vld [vmem:[%s1146 + $0xb8] sm:$0xff]
        %v1419 = vld [vmem:[%s1146 + $0xc0] sm:$0xff]
        %v1420 = vld [vmem:[%s1146 + $0xc8] sm:$0xff]
        %v1421 = vld [vmem:[%s1146 + $0xd0] sm:$0xff]
        %v1422 = vld [vmem:[%s1146 + $0xd8] sm:$0xff]
        %v1423 = vld [vmem:[%s1146 + $0xe0] sm:$0xff]
        %v1424 = vld [vmem:[%s1146 + $0xe8] sm:$0xff]
        %v1425 = vld [vmem:[%s1146 + $0xf0] sm:$0xff]
        %v1426 = vld [vmem:[%s1146 + $0xf8] sm:$0xff]
        %v1427 = vld [vmem:[%s1149] sm:$0x1]
        %v1429 = vlaneseq
        %v1430 = vshrl.u32 %v1429, 7
        %v1431 = vsub.s32 0, %v1430
        %v1432 = vrot.slane %v1427, %v1431
        %1434 = vmatprep.subr.mxu0 0.0
        %1435 = vmatpush1.msra.mxu0 %v1410
        %1436 = vmatprep.subr.mxu0 0.0
        %1437 = vmatpush1.msra.mxu0 %v1409
        %1438 = vmatprep.subr.mxu0 0.0
        %1439 = vmatpush1.msra.mxu0 %v1408
        %1440 = vmatprep.subr.mxu0 0.0
        %1441 = vmatpush1.msra.mxu0 %v1407
        %1442 = vmatprep.subr.mxu0 0.0
        %1443 = vmatpush1.msra.mxu0 %v1406
        %1444 = vmatprep.subr.mxu0 0.0
        %1445 = vmatpush1.msra.mxu0 %v1405
        %1446 = vmatprep.subr.mxu0 0.0
        %1447 = vmatpush1.msra.mxu0 %v1404
        %1448 = vmatprep.subr.mxu0 0.0
        %1449 = vmatpush1.msra.mxu0 %v1403
        %1450 = vmatprep.subr.mxu0 0.0
        %1451 = vmatpush1.msra.mxu0 %v1402
        %1452 = vmatprep.subr.mxu0 0.0
        %1453 = vmatpush1.msra.mxu0 %v1401
        %1454 = vmatprep.subr.mxu0 0.0
        %1455 = vmatpush1.msra.mxu0 %v1400
        %1456 = vmatprep.subr.mxu0 0.0
        %1457 = vmatpush1.msra.mxu0 %v1399
        %1458 = vmatprep.subr.mxu0 0.0
        %1459 = vmatpush1.msra.mxu0 %v1398
        %1460 = vmatprep.subr.mxu0 0.0
        %1461 = vmatpush1.msra.mxu0 %v1397
        %1462 = vmatprep.subr.mxu0 0.0
        %1463 = vmatpush1.msra.mxu0 %v1396
        %1464 = vmatprep.subr.mxu0 0.0
        %1465 = vmatpush1.msra.mxu0 %v1395
        %1466 = vmatprep.subr.mxu0 0.0
        %1467 = vmatpush2.msra.mxu0 %v1426
        %1468 = vmatprep.subr.mxu0 0.0
        %1469 = vmatpush2.msra.mxu0 %v1425
        %1470 = vmatprep.subr.mxu0 0.0
        %1471 = vmatpush2.msra.mxu0 %v1424
        %1472 = vmatprep.subr.mxu0 0.0
        %1473 = vmatpush2.msra.mxu0 %v1423
        %1474 = vmatprep.subr.mxu0 0.0
        %1475 = vmatpush2.msra.mxu0 %v1422
        %1476 = vmatprep.subr.mxu0 0.0
        %1477 = vmatpush2.msra.mxu0 %v1421
        %1478 = vmatprep.subr.mxu0 0.0
        %1479 = vmatpush2.msra.mxu0 %v1420
        %1480 = vmatprep.subr.mxu0 0.0
        %1481 = vmatpush2.msra.mxu0 %v1419
        %1482 = vmatprep.subr.mxu0 0.0
        %1483 = vmatpush2.msra.mxu0 %v1418
        %1484 = vmatprep.subr.mxu0 0.0
        %1485 = vmatpush2.msra.mxu0 %v1417
        %1486 = vmatprep.subr.mxu0 0.0
        %1487 = vmatpush2.msra.mxu0 %v1416
        %1488 = vmatprep.subr.mxu0 0.0
        %1489 = vmatpush2.msra.mxu0 %v1415
        %1490 = vmatprep.subr.mxu0 0.0
        %1491 = vmatpush2.msra.mxu0 %v1414
        %1492 = vmatprep.subr.mxu0 0.0
        %1493 = vmatpush2.msra.mxu0 %v1413
        %1494 = vmatprep.subr.mxu0 0.0
        %1495 = vmatpush2.msra.mxu0 %v1412
        %1496 = vmatprep.subr.mxu0 0.0
        %1497 = vmatpush2.msra.mxu0 %v1411
        %1498 = vmatprep.mubr.f32.mxu0 %v1394
        %1499 = vmatmul.mubr.f32.gmra.mxu0 %v1393
        %v1500 = vpop.f32.mrf.mxu0
        %v1501 = vadd.f32 %v1432, %v1500
        %v1502 = vpop.f32.mrf.mxu0
        %1503 = vdwg.mxu0
        %v1504 = vld [vmem:[%s1154] sm:$0xff]
        %v1505 = vld [vmem:[%s1154 + $0x8] sm:$0xff]
        %v1506 = vld [vmem:[%s1154 + $0x10] sm:$0xff]
        %v1507 = vld [vmem:[%s1154 + $0x18] sm:$0xff]
        %v1508 = vld [vmem:[%s1154 + $0x20] sm:$0xff]
        %v1509 = vld [vmem:[%s1154 + $0x28] sm:$0xff]
        %v1510 = vld [vmem:[%s1154 + $0x30] sm:$0xff]
        %v1511 = vld [vmem:[%s1154 + $0x38] sm:$0xff]
        %v1512 = vld [vmem:[%s1154 + $0x40] sm:$0xff]
        %v1513 = vld [vmem:[%s1154 + $0x48] sm:$0xff]
        %v1514 = vld [vmem:[%s1154 + $0x50] sm:$0xff]
        %v1515 = vld [vmem:[%s1154 + $0x58] sm:$0xff]
        %v1516 = vld [vmem:[%s1154 + $0x60] sm:$0xff]
        %v1517 = vld [vmem:[%s1154 + $0x68] sm:$0xff]
        %v1518 = vld [vmem:[%s1154 + $0x70] sm:$0xff]
        %v1519 = vld [vmem:[%s1154 + $0x78] sm:$0xff]
        %v1520 = vld [vmem:[%s1154 + $0x80] sm:$0xff]
        %v1521 = vld [vmem:[%s1154 + $0x88] sm:$0xff]
        %v1522 = vld [vmem:[%s1154 + $0x90] sm:$0xff]
        %v1523 = vld [vmem:[%s1154 + $0x98] sm:$0xff]
        %v1524 = vld [vmem:[%s1154 + $0xa0] sm:$0xff]
        %v1525 = vld [vmem:[%s1154 + $0xa8] sm:$0xff]
        %v1526 = vld [vmem:[%s1154 + $0xb0] sm:$0xff]
        %v1527 = vld [vmem:[%s1154 + $0xb8] sm:$0xff]
        %v1528 = vld [vmem:[%s1154 + $0xc0] sm:$0xff]
        %v1529 = vld [vmem:[%s1154 + $0xc8] sm:$0xff]
        %v1530 = vld [vmem:[%s1154 + $0xd0] sm:$0xff]
        %v1531 = vld [vmem:[%s1154 + $0xd8] sm:$0xff]
        %v1532 = vld [vmem:[%s1154 + $0xe0] sm:$0xff]
        %v1533 = vld [vmem:[%s1154 + $0xe8] sm:$0xff]
        %v1534 = vld [vmem:[%s1154 + $0xf0] sm:$0xff]
        %v1535 = vld [vmem:[%s1154 + $0xf8] sm:$0xff]
        %v1536 = vld [vmem:[%s1157] sm:$0x1]
        %v1538 = vlaneseq
        %v1539 = vshrl.u32 %v1538, 7
        %v1540 = vsub.s32 0, %v1539
        %v1541 = vrot.slane %v1536, %v1540
        %1543 = vmatprep.subr.mxu0 0.0
        %1544 = vmatpush1.msra.mxu0 %v1519
        %1545 = vmatprep.subr.mxu0 0.0
        %1546 = vmatpush1.msra.mxu0 %v1518
        %1547 = vmatprep.subr.mxu0 0.0
        %1548 = vmatpush1.msra.mxu0 %v1517
        %1549 = vmatprep.subr.mxu0 0.0
        %1550 = vmatpush1.msra.mxu0 %v1516
        %1551 = vmatprep.subr.mxu0 0.0
        %1552 = vmatpush1.msra.mxu0 %v1515
        %1553 = vmatprep.subr.mxu0 0.0
        %1554 = vmatpush1.msra.mxu0 %v1514
        %1555 = vmatprep.subr.mxu0 0.0
        %1556 = vmatpush1.msra.mxu0 %v1513
        %1557 = vmatprep.subr.mxu0 0.0
        %1558 = vmatpush1.msra.mxu0 %v1512
        %1559 = vmatprep.subr.mxu0 0.0
        %1560 = vmatpush1.msra.mxu0 %v1511
        %1561 = vmatprep.subr.mxu0 0.0
        %1562 = vmatpush1.msra.mxu0 %v1510
        %1563 = vmatprep.subr.mxu0 0.0
        %1564 = vmatpush1.msra.mxu0 %v1509
        %1565 = vmatprep.subr.mxu0 0.0
        %1566 = vmatpush1.msra.mxu0 %v1508
        %1567 = vmatprep.subr.mxu0 0.0
        %1568 = vmatpush1.msra.mxu0 %v1507
        %1569 = vmatprep.subr.mxu0 0.0
        %1570 = vmatpush1.msra.mxu0 %v1506
        %1571 = vmatprep.subr.mxu0 0.0
        %1572 = vmatpush1.msra.mxu0 %v1505
        %1573 = vmatprep.subr.mxu0 0.0
        %1574 = vmatpush1.msra.mxu0 %v1504
        %1575 = vmatprep.subr.mxu0 0.0
        %1576 = vmatpush2.msra.mxu0 %v1535
        %1577 = vmatprep.subr.mxu0 0.0
        %1578 = vmatpush2.msra.mxu0 %v1534
        %1579 = vmatprep.subr.mxu0 0.0
        %1580 = vmatpush2.msra.mxu0 %v1533
        %1581 = vmatprep.subr.mxu0 0.0
        %1582 = vmatpush2.msra.mxu0 %v1532
        %1583 = vmatprep.subr.mxu0 0.0
        %1584 = vmatpush2.msra.mxu0 %v1531
        %1585 = vmatprep.subr.mxu0 0.0
        %1586 = vmatpush2.msra.mxu0 %v1530
        %1587 = vmatprep.subr.mxu0 0.0
        %1588 = vmatpush2.msra.mxu0 %v1529
        %1589 = vmatprep.subr.mxu0 0.0
        %1590 = vmatpush2.msra.mxu0 %v1528
        %1591 = vmatprep.subr.mxu0 0.0
        %1592 = vmatpush2.msra.mxu0 %v1527
        %1593 = vmatprep.subr.mxu0 0.0
        %1594 = vmatpush2.msra.mxu0 %v1526
        %1595 = vmatprep.subr.mxu0 0.0
        %1596 = vmatpush2.msra.mxu0 %v1525
        %1597 = vmatprep.subr.mxu0 0.0
        %1598 = vmatpush2.msra.mxu0 %v1524
        %1599 = vmatprep.subr.mxu0 0.0
        %1600 = vmatpush2.msra.mxu0 %v1523
        %1601 = vmatprep.subr.mxu0 0.0
        %1602 = vmatpush2.msra.mxu0 %v1522
        %1603 = vmatprep.subr.mxu0 0.0
        %1604 = vmatpush2.msra.mxu0 %v1521
        %1605 = vmatprep.subr.mxu0 0.0
        %1606 = vmatpush2.msra.mxu0 %v1520
        %1607 = vmatprep.mubr.f32.mxu0 %v1394
        %1608 = vmatmul.mubr.f32.gmra.mxu0 %v1393
        %v1609 = vpop.f32.mrf.mxu0
        %v1610 = vadd.f32 %v1541, %v1609
        %v1611 = vpop.f32.mrf.mxu0
        %1612 = vdwg.mxu0
        %v1613 = vmul.f32 %v1610, 0.5
        %v1614 = vmul.f32 %v1613, 1.442695
        %v1615 = vpow.pop %v1614
        %v1616 = vmul.f32 %v1177, %v1615
        %v1617 = vadd.f32 %v1616, %v1501
        %v1618 = vld [vmem:[%s1162] sm:$0xff]
        %v1619 = vld [vmem:[%s1162 + $0x8] sm:$0xff]
        %v1620 = vld [vmem:[%s1162 + $0x10] sm:$0xff]
        %v1621 = vld [vmem:[%s1162 + $0x18] sm:$0xff]
        %v1622 = vld [vmem:[%s1162 + $0x20] sm:$0xff]
        %v1623 = vld [vmem:[%s1162 + $0x28] sm:$0xff]
        %v1624 = vld [vmem:[%s1162 + $0x30] sm:$0xff]
        %v1625 = vld [vmem:[%s1162 + $0x38] sm:$0xff]
        %v1626 = vld [vmem:[%s1162 + $0x40] sm:$0xff]
        %v1627 = vld [vmem:[%s1162 + $0x48] sm:$0xff]
        %v1628 = vld [vmem:[%s1162 + $0x50] sm:$0xff]
        %v1629 = vld [vmem:[%s1162 + $0x58] sm:$0xff]
        %v1630 = vld [vmem:[%s1162 + $0x60] sm:$0xff]
        %v1631 = vld [vmem:[%s1162 + $0x68] sm:$0xff]
        %v1632 = vld [vmem:[%s1162 + $0x70] sm:$0xff]
        %v1633 = vld [vmem:[%s1162 + $0x78] sm:$0xff]
        %v1634 = vld [vmem:[%s981] sm:$0xff]
        %v1635 = vld [vmem:[%s981 + $0x8] sm:$0xff]
        %v1636 = vld [vmem:[%s981 + $0x10] sm:$0xff]
        %v1637 = vld [vmem:[%s981 + $0x18] sm:$0xff]
        %v1638 = vld [vmem:[%s981 + $0x20] sm:$0xff]
        %v1639 = vld [vmem:[%s981 + $0x28] sm:$0xff]
        %1640 = vmatprep.subr.mxu0 0.0
        %1641 = vmatpush1.msra.mxu0 0.0
        %1642 = vmatprep.subr.mxu0 0.0
        %1643 = vmatpush1.msra.mxu0 0.0
        %1644 = vmatprep.subr.mxu0 0.0
        %1645 = vmatpush1.msra.mxu0 0.0
        %1646 = vmatprep.subr.mxu0 0.0
        %1647 = vmatpush1.msra.mxu0 0.0
        %1648 = vmatprep.subr.mxu0 0.0
        %1649 = vmatpush1.msra.mxu0 0.0
        %1650 = vmatprep.subr.mxu0 0.0
        %1651 = vmatpush1.msra.mxu0 0.0
        %1652 = vmatprep.subr.mxu0 0.0
        %1653 = vmatpush1.msra.mxu0 0.0
        %1654 = vmatprep.subr.mxu0 0.0
        %1655 = vmatpush1.msra.mxu0 0.0
        %1656 = vmatprep.subr.mxu0 0.0
        %1657 = vmatpush1.msra.mxu0 0.0
        %1658 = vmatprep.subr.mxu0 0.0
        %1659 = vmatpush1.msra.mxu0 0.0
        %1660 = vmatprep.subr.mxu0 0.0
        %1661 = vmatpush1.msra.mxu0 0.0
        %1662 = vmatprep.subr.mxu0 0.0
        %1663 = vmatpush1.msra.mxu0 0.0
        %1664 = vmatprep.subr.mxu0 0.0
        %1665 = vmatpush1.msra.mxu0 0.0
        %1666 = vmatprep.subr.mxu0 %v1639
        %1667 = vmatpush1.msra.mxu0 %v1638
        %1668 = vmatprep.subr.mxu0 %v1637
        %1669 = vmatpush1.msra.mxu0 %v1636
        %1670 = vmatprep.subr.mxu0 %v1635
        %1671 = vmatpush1.msra.mxu0 %v1634
        %1672 = vmatprep.subr.mxu0 0.0
        %1673 = vmatpush2.msra.mxu0 0.0
        %1674 = vmatprep.subr.mxu0 0.0
        %1675 = vmatpush2.msra.mxu0 0.0
        %1676 = vmatprep.subr.mxu0 0.0
        %1677 = vmatpush2.msra.mxu0 0.0
        %1678 = vmatprep.subr.mxu0 0.0
        %1679 = vmatpush2.msra.mxu0 0.0
        %1680 = vmatprep.subr.mxu0 0.0
        %1681 = vmatpush2.msra.mxu0 0.0
        %1682 = vmatprep.subr.mxu0 0.0
        %1683 = vmatpush2.msra.mxu0 0.0
        %1684 = vmatprep.subr.mxu0 0.0
        %1685 = vmatpush2.msra.mxu0 0.0
        %1686 = vmatprep.subr.mxu0 0.0
        %1687 = vmatpush2.msra.mxu0 0.0
        %1688 = vmatprep.subr.mxu0 0.0
        %1689 = vmatpush2.msra.mxu0 0.0
        %1690 = vmatprep.subr.mxu0 0.0
        %1691 = vmatpush2.msra.mxu0 0.0
        %1692 = vmatprep.subr.mxu0 0.0
        %1693 = vmatpush2.msra.mxu0 0.0
        %1694 = vmatprep.subr.mxu0 0.0
        %1695 = vmatpush2.msra.mxu0 0.0
        %1696 = vmatprep.subr.mxu0 0.0
        %1697 = vmatpush2.msra.mxu0 0.0
        %1698 = vmatprep.subr.mxu0 0.0
        %1699 = vmatpush2.msra.mxu0 0.0
        %1700 = vmatprep.subr.mxu0 0.0
        %1701 = vmatpush2.msra.mxu0 0.0
        %1702 = vmatprep.subr.mxu0 0.0
        %1703 = vmatpush2.msra.mxu0 0.0
        %1704 = vmatprep.mubr.f32.mxu0 0.0
        %1705 = vmatmul.mubr.f32.gmra.mxu0 %v1235
        %v1706 = vpop.f32.mrf.mxu0
        %v1707 = vadd.f32 0.0, %v1706
        %v1708 = vpop.f32.mrf.mxu0
        %v1709 = vadd.f32 0.0, %v1708
        %1710 = vdwg.mxu0
        %vm1711 = vcmask 523264
        %v1713 = vsel %vm1711, %v1617, 0
        %1715 = vmatprep.subr.mxu0 0.0
        %1716 = vmatpush1.msra.mxu0 0.0
        %1717 = vmatprep.subr.mxu0 0.0
        %1718 = vmatpush1.msra.mxu0 0.0
        %1719 = vmatprep.subr.mxu0 0.0
        %1720 = vmatpush1.msra.mxu0 0.0
        %1721 = vmatprep.subr.mxu0 0.0
        %1722 = vmatpush1.msra.mxu0 0.0
        %1723 = vmatprep.subr.mxu0 0.0
        %1724 = vmatpush1.msra.mxu0 0.0
        %1725 = vmatprep.subr.mxu0 0.0
        %1726 = vmatpush1.msra.mxu0 0.0
        %1727 = vmatprep.subr.mxu0 0.0
        %1728 = vmatpush1.msra.mxu0 0.0
        %1729 = vmatprep.subr.mxu0 0.0
        %1730 = vmatpush1.msra.mxu0 0.0
        %1731 = vmatprep.subr.mxu0 %v1633
        %1732 = vmatpush1.msra.mxu0 %v1632
        %1733 = vmatprep.subr.mxu0 %v1631
        %1734 = vmatpush1.msra.mxu0 %v1630
        %1735 = vmatprep.subr.mxu0 %v1629
        %1736 = vmatpush1.msra.mxu0 %v1628
        %1737 = vmatprep.subr.mxu0 %v1627
        %1738 = vmatpush1.msra.mxu0 %v1626
        %1739 = vmatprep.subr.mxu0 %v1625
        %1740 = vmatpush1.msra.mxu0 %v1624
        %1741 = vmatprep.subr.mxu0 %v1623
        %1742 = vmatpush1.msra.mxu0 %v1622
        %1743 = vmatprep.subr.mxu0 %v1621
        %1744 = vmatpush1.msra.mxu0 %v1620
        %1745 = vmatprep.subr.mxu0 %v1619
        %1746 = vmatpush1.msra.mxu0 %v1618
        %1747 = vmatprep.subr.mxu0 0.0
        %1748 = vmatpush2.msra.mxu0 0.0
        %1749 = vmatprep.subr.mxu0 0.0
        %1750 = vmatpush2.msra.mxu0 0.0
        %1751 = vmatprep.subr.mxu0 0.0
        %1752 = vmatpush2.msra.mxu0 0.0
        %1753 = vmatprep.subr.mxu0 0.0
        %1754 = vmatpush2.msra.mxu0 0.0
        %1755 = vmatprep.subr.mxu0 0.0
        %1756 = vmatpush2.msra.mxu0 0.0
        %1757 = vmatprep.subr.mxu0 0.0
        %1758 = vmatpush2.msra.mxu0 0.0
        %1759 = vmatprep.subr.mxu0 0.0
        %1760 = vmatpush2.msra.mxu0 0.0
        %1761 = vmatprep.subr.mxu0 0.0
        %1762 = vmatpush2.msra.mxu0 0.0
        %1763 = vmatprep.subr.mxu0 0.0
        %1764 = vmatpush2.msra.mxu0 0.0
        %1765 = vmatprep.subr.mxu0 0.0
        %1766 = vmatpush2.msra.mxu0 0.0
        %1767 = vmatprep.subr.mxu0 0.0
        %1768 = vmatpush2.msra.mxu0 0.0
        %1769 = vmatprep.subr.mxu0 0.0
        %1770 = vmatpush2.msra.mxu0 0.0
        %1771 = vmatprep.subr.mxu0 0.0
        %1772 = vmatpush2.msra.mxu0 0.0
        %1773 = vmatprep.subr.mxu0 0.0
        %1774 = vmatpush2.msra.mxu0 0.0
        %1775 = vmatprep.subr.mxu0 0.0
        %1776 = vmatpush2.msra.mxu0 0.0
        %1777 = vmatprep.subr.mxu0 0.0
        %1778 = vmatpush2.msra.mxu0 0.0
        %1779 = vmatprep.mubr.f32.mxu0 0.0
        %1780 = vmatmul.mubr.f32.gmra.mxu0 %v1713
        %v1781 = vpop.f32.mrf.mxu0
        %v1782 = vadd.f32 %v1707, %v1781
        %v1783 = vpop.f32.mrf.mxu0
        %v1784 = vadd.f32 %v1709, %v1783
        %1785 = vdwg.mxu0
        %v1786 = vld [vmem:[%s1166] sm:$0x3]
        %v1788 = vlaneseq
        %v1789 = vshrl.u32 %v1788, 7
        %v1790 = vsub.s32 0, %v1789
        %v1791 = vrot.slane %v1786, %v1790
        %v1792 = vlaneseq
        %v1793 = vshrl.u32 %v1792, 7
        %v1794 = vsub.s32 1, %v1793
        %v1795 = vrot.slane %v1786, %v1794
        %v1798 = vadd.f32 %v1782, %v1791
        %v1799 = vadd.f32 %v1784, %v1795
        %v1800 = vmax.f32 %v1798, 0.0
        %v1801 = vmax.f32 %v1799, 0.0
        %v1802 = vld [vmem:[%s1171] sm:$0xff]
        %v1803 = vld [vmem:[%s1171 + $0x8] sm:$0xff]
        %v1804 = vld [vmem:[%s1171 + $0x10] sm:$0xff]
        %v1805 = vld [vmem:[%s1171 + $0x18] sm:$0xff]
        %v1806 = vld [vmem:[%s1171 + $0x20] sm:$0xff]
        %v1807 = vld [vmem:[%s1171 + $0x28] sm:$0xff]
        %v1808 = vld [vmem:[%s1171 + $0x30] sm:$0xff]
        %v1809 = vld [vmem:[%s1171 + $0x38] sm:$0xff]
        %v1810 = vld [vmem:[%s1171 + $0x40] sm:$0xff]
        %v1811 = vld [vmem:[%s1171 + $0x48] sm:$0xff]
        %v1812 = vld [vmem:[%s1171 + $0x50] sm:$0xff]
        %v1813 = vld [vmem:[%s1171 + $0x58] sm:$0xff]
        %v1814 = vld [vmem:[%s1171 + $0x60] sm:$0xff]
        %v1815 = vld [vmem:[%s1171 + $0x68] sm:$0xff]
        %v1816 = vld [vmem:[%s1171 + $0x70] sm:$0xff]
        %v1817 = vld [vmem:[%s1171 + $0x78] sm:$0xff]
        %v1818 = vld [vmem:[%s1171 + $0x80] sm:$0xff]
        %v1819 = vld [vmem:[%s1171 + $0x88] sm:$0xff]
        %v1820 = vld [vmem:[%s1171 + $0x90] sm:$0xff]
        %v1821 = vld [vmem:[%s1171 + $0x98] sm:$0xff]
        %v1822 = vld [vmem:[%s1171 + $0xa0] sm:$0xff]
        %v1823 = vld [vmem:[%s1171 + $0xa8] sm:$0xff]
        %v1824 = vld [vmem:[%s1171 + $0xb0] sm:$0xff]
        %v1825 = vld [vmem:[%s1171 + $0xb8] sm:$0xff]
        %v1826 = vld [vmem:[%s1171 + $0xc0] sm:$0xff]
        %v1827 = vld [vmem:[%s1171 + $0xc8] sm:$0xff]
        %v1828 = vld [vmem:[%s1171 + $0xd0] sm:$0xff]
        %v1829 = vld [vmem:[%s1171 + $0xd8] sm:$0xff]
        %v1830 = vld [vmem:[%s1171 + $0xe0] sm:$0xff]
        %v1831 = vld [vmem:[%s1171 + $0xe8] sm:$0xff]
        %v1832 = vld [vmem:[%s1171 + $0xf0] sm:$0xff]
        %v1833 = vld [vmem:[%s1171 + $0xf8] sm:$0xff]
        %v1834 = vld [vmem:[%s1174] sm:$0x1]
        %v1836 = vlaneseq
        %v1837 = vshrl.u32 %v1836, 7
        %v1838 = vsub.s32 0, %v1837
        %v1839 = vrot.slane %v1834, %v1838
        %1841 = vmatprep.subr.mxu0 0.0
        %1842 = vmatpush1.msra.mxu0 %v1817
        %1843 = vmatprep.subr.mxu0 0.0
        %1844 = vmatpush1.msra.mxu0 %v1816
        %1845 = vmatprep.subr.mxu0 0.0
        %1846 = vmatpush1.msra.mxu0 %v1815
        %1847 = vmatprep.subr.mxu0 0.0
        %1848 = vmatpush1.msra.mxu0 %v1814
        %1849 = vmatprep.subr.mxu0 0.0
        %1850 = vmatpush1.msra.mxu0 %v1813
        %1851 = vmatprep.subr.mxu0 0.0
        %1852 = vmatpush1.msra.mxu0 %v1812
        %1853 = vmatprep.subr.mxu0 0.0
        %1854 = vmatpush1.msra.mxu0 %v1811
        %1855 = vmatprep.subr.mxu0 0.0
        %1856 = vmatpush1.msra.mxu0 %v1810
        %1857 = vmatprep.subr.mxu0 0.0
        %1858 = vmatpush1.msra.mxu0 %v1809
        %1859 = vmatprep.subr.mxu0 0.0
        %1860 = vmatpush1.msra.mxu0 %v1808
        %1861 = vmatprep.subr.mxu0 0.0
        %1862 = vmatpush1.msra.mxu0 %v1807
        %1863 = vmatprep.subr.mxu0 0.0
        %1864 = vmatpush1.msra.mxu0 %v1806
        %1865 = vmatprep.subr.mxu0 0.0
        %1866 = vmatpush1.msra.mxu0 %v1805
        %1867 = vmatprep.subr.mxu0 0.0
        %1868 = vmatpush1.msra.mxu0 %v1804
        %1869 = vmatprep.subr.mxu0 0.0
        %1870 = vmatpush1.msra.mxu0 %v1803
        %1871 = vmatprep.subr.mxu0 0.0
        %1872 = vmatpush1.msra.mxu0 %v1802
        %1873 = vmatprep.subr.mxu0 0.0
        %1874 = vmatpush2.msra.mxu0 %v1833
        %1875 = vmatprep.subr.mxu0 0.0
        %1876 = vmatpush2.msra.mxu0 %v1832
        %1877 = vmatprep.subr.mxu0 0.0
        %1878 = vmatpush2.msra.mxu0 %v1831
        %1879 = vmatprep.subr.mxu0 0.0
        %1880 = vmatpush2.msra.mxu0 %v1830
        %1881 = vmatprep.subr.mxu0 0.0
        %1882 = vmatpush2.msra.mxu0 %v1829
        %1883 = vmatprep.subr.mxu0 0.0
        %1884 = vmatpush2.msra.mxu0 %v1828
        %1885 = vmatprep.subr.mxu0 0.0
        %1886 = vmatpush2.msra.mxu0 %v1827
        %1887 = vmatprep.subr.mxu0 0.0
        %1888 = vmatpush2.msra.mxu0 %v1826
        %1889 = vmatprep.subr.mxu0 0.0
        %1890 = vmatpush2.msra.mxu0 %v1825
        %1891 = vmatprep.subr.mxu0 0.0
        %1892 = vmatpush2.msra.mxu0 %v1824
        %1893 = vmatprep.subr.mxu0 0.0
        %1894 = vmatpush2.msra.mxu0 %v1823
        %1895 = vmatprep.subr.mxu0 0.0
        %1896 = vmatpush2.msra.mxu0 %v1822
        %1897 = vmatprep.subr.mxu0 0.0
        %1898 = vmatpush2.msra.mxu0 %v1821
        %1899 = vmatprep.subr.mxu0 0.0
        %1900 = vmatpush2.msra.mxu0 %v1820
        %1901 = vmatprep.subr.mxu0 0.0
        %1902 = vmatpush2.msra.mxu0 %v1819
        %1903 = vmatprep.subr.mxu0 0.0
        %1904 = vmatpush2.msra.mxu0 %v1818
        %1905 = vmatprep.mubr.f32.mxu0 %v1801
        %1906 = vmatmul.mubr.f32.gmra.mxu0 %v1800
        %v1907 = vpop.f32.mrf.mxu0
        %v1908 = vadd.f32 %v1839, %v1907
        %v1909 = vpop.f32.mrf.mxu0
        %1910 = vdwg.mxu0
        %v1911 = vadd.f32 %v1908, %v1185
        %v1913 = vlaneseq
        %v1914 = vshrl.u32 %v1913, 7
        %v1915 = vsub.s32 0, %v1914
        %v1916 = vrot.slane %v1179, %v1915
        %v1918 = vmul.f32 %v1911, %v1916
        %1919 = vst [vmem:[%s1108] sm:$0xff] %v1918
        %1920 = vst [vmem:[%s1115] sm:$0xff] %v1194
        %1921 = vst [vmem:[%s1122] sm:$0xff] %v1908
        %1922 = vst.msk [vmem:[%s1129] sm:$0xff] %vm1711, %v1501
        %1923 = vst.msk [vmem:[%s1136] sm:$0xff] %vm1711, %v1610
        %s1924 = sand.u32 %s534, 1
        %s1925 = scalar_lea.sflag [#allocation4], %s1924
        %s1926 = sand.u32 %s534, 1
        %s1927 = smul.addr %s1926, 8
        %s1928 = scalar_lea.vmem [#allocation17], %s1927
        %s1929 = sand.u32 %s58, 1
        %s1930 = scalar_lea.sflag [#allocation19], %s1929
        %s1931 = sand.u32 %s560, 1
        %s1932 = smul.addr %s1931, 8
        %s1933 = scalar_lea.vmem [#allocation18], %s1932
        %s1934 = sand.u32 %s58, 1
        %s1935 = scalar_lea.sflag [#allocation19], %s1934
        %s1936 = sand.u32 %s586, 1
        %s1937 = smul.addr %s1936, 8
        %s1938 = scalar_lea.vmem [#allocation20], %s1937
        %s1939 = sand.u32 %s58, 1
        %s1940 = scalar_lea.sflag [#allocation22], %s1939
        %s1941 = sand.u32 %s612, 1
        %s1942 = smul.addr %s1941, 8
        %s1943 = scalar_lea.vmem [#allocation21], %s1942
        %s1944 = sand.u32 %s58, 1
        %s1945 = scalar_lea.sflag [#allocation22], %s1944
        %s1946 = sand.u32 %s638, 1
        %s1947 = smul.addr %s1946, 8
        %s1948 = scalar_lea.vmem [#allocation23], %s1947
        // Predicated region
        $region129: #{tpu_custom_call.1} parent=91 // pred_check
          %p1949 = pneg %p544
        $region130: #{tpu_custom_call.1} parent=91 // pred_check_branch
          %1951 = sbr.rel (%p1949) target = $region132
        $region131: #{tpu_custom_call.1} parent=91 // pred_region
          %s1953 = ssub.s32 128, 128
          %1954 = vsyncadd %s1925, %s1953
          %s1955 = smul.addr %s58, 128
          %s1956 = scalar_lea.hbm %s18, %s1955
          %s1958 = sshll.u32 %s1928, 4
          %s1959 = int_to_ptr.vmem [resolvable:$true] %s1958
          %1961 = dma.vmem_to_hbm [thread:$0]  %s1959, 128, %s1956, %s1925
        $region132: #{tpu_custom_call.1} parent=91 // pred_fallthru
          _
        // Predicated region
        $region133: #{tpu_custom_call.1} parent=91 // pred_check
          %p1962 = pneg %p570
        $region134: #{tpu_custom_call.1} parent=91 // pred_check_branch
          %1964 = sbr.rel (%p1962) target = $region136
        $region135: #{tpu_custom_call.1} parent=91 // pred_region
          %s1966 = ssub.s32 128, 128
          %1967 = vsyncadd %s1930, %s1966
          %s1968 = smul.addr %s58, 128
          %s1969 = scalar_lea.hbm %s19, %s1968
          %s1971 = sshll.u32 %s1933, 4
          %s1972 = int_to_ptr.vmem [resolvable:$true] %s1971
          %1974 = dma.vmem_to_hbm [thread:$0]  %s1972, 128, %s1969, %s1930
        $region136: #{tpu_custom_call.1} parent=91 // pred_fallthru
          _
        // Predicated region
        $region137: #{tpu_custom_call.1} parent=91 // pred_check
          %p1975 = pneg %p596
        $region138: #{tpu_custom_call.1} parent=91 // pred_check_branch
          %1977 = sbr.rel (%p1975) target = $region140
        $region139: #{tpu_custom_call.1} parent=91 // pred_region
          %s1979 = ssub.s32 128, 128
          %1980 = vsyncadd %s1935, %s1979
          %s1981 = smul.addr %s58, 128
          %s1982 = scalar_lea.hbm %s20, %s1981
          %s1984 = sshll.u32 %s1938, 4
          %s1985 = int_to_ptr.vmem [resolvable:$true] %s1984
          %1987 = dma.vmem_to_hbm [thread:$0]  %s1985, 128, %s1982, %s1935
        $region140: #{tpu_custom_call.1} parent=91 // pred_fallthru
          _
        // Predicated region
        $region141: #{tpu_custom_call.1} parent=91 // pred_check
          %p1988 = pneg %p622
        $region142: #{tpu_custom_call.1} parent=91 // pred_check_branch
          %1990 = sbr.rel (%p1988) target = $region144
        $region143: #{tpu_custom_call.1} parent=91 // pred_region
          %s1992 = ssub.s32 128, 128
          %1993 = vsyncadd %s1940, %s1992
          %s1994 = smul.addr %s58, 128
          %s1995 = scalar_lea.hbm %s21, %s1994
          %s1997 = sshll.u32 %s1943, 4
          %s1998 = int_to_ptr.vmem [resolvable:$true] %s1997
          %2000 = dma.vmem_to_hbm [thread:$0]  %s1998, 128, %s1995, %s1940
        $region144: #{tpu_custom_call.1} parent=91 // pred_fallthru
          _
        // Predicated region
        $region145: #{tpu_custom_call.1} parent=91 // pred_check
          %p2001 = pneg %p648
        $region146: #{tpu_custom_call.1} parent=91 // pred_check_branch
          %2003 = sbr.rel (%p2001) target = $region148
        $region147: #{tpu_custom_call.1} parent=91 // pred_region
          %s2005 = ssub.s32 128, 128
          %2006 = vsyncadd %s1945, %s2005
          %s2007 = smul.addr %s58, 128
          %s2008 = scalar_lea.hbm %s22, %s2007
          %s2010 = sshll.u32 %s1948, 4
          %s2011 = int_to_ptr.vmem [resolvable:$true] %s2010
          %2013 = dma.vmem_to_hbm [thread:$0]  %s2011, 128, %s2008, %s1945
        $region148: #{tpu_custom_call.1} parent=91 // pred_fallthru
          _
      $region92: #{tpu_custom_call.1} parent=5 // pred_fallthru
        _
      %p2014 = scmp.le.s32.totalorder 2, %s53
      // Predicated region
      $region149: #{tpu_custom_call.1} parent=5 // pred_check
        %p2015 = pneg %p2014
      $region150: #{tpu_custom_call.1} parent=5 // pred_check_branch
        %2017 = sbr.rel (%p2015) target = $region152
      $region151: #{tpu_custom_call.1} parent=5 // pred_region
        %s2018 = ssub.s32 %s53, 2
        // Predicated region
        $region153: #{tpu_custom_call.1} parent=151 // pred_check
          %p2019 = pneg %p550
        $region154: #{tpu_custom_call.1} parent=151 // pred_check_branch
          %2021 = sbr.rel (%p2019) target = $region156
        $region155: #{tpu_custom_call.1} parent=151 // pred_region
          %s2022 = sand.u32 %s535, 1
          %s2023 = scalar_lea.sflag [#allocation4], %s2022
          %s2024 = sand.u32 %s535, 1
          %s2025 = smul.addr %s2024, 8
          %s2026 = scalar_lea.vmem [#allocation17], %s2025
          %2027 = dma.done %s2023, 128
        $region156: #{tpu_custom_call.1} parent=151 // pred_fallthru
          _
        // Predicated region
        $region157: #{tpu_custom_call.1} parent=151 // pred_check
          %p2028 = pneg %p576
        $region158: #{tpu_custom_call.1} parent=151 // pred_check_branch
          %2030 = sbr.rel (%p2028) target = $region160
        $region159: #{tpu_custom_call.1} parent=151 // pred_region
          %s2031 = sand.u32 %s59, 1
          %s2032 = scalar_lea.sflag [#allocation19], %s2031
          %s2033 = sand.u32 %s561, 1
          %s2034 = smul.addr %s2033, 8
          %s2035 = scalar_lea.vmem [#allocation18], %s2034
          %2036 = dma.done %s2032, 128
        $region160: #{tpu_custom_call.1} parent=151 // pred_fallthru
          _
        // Predicated region
        $region161: #{tpu_custom_call.1} parent=151 // pred_check
          %p2037 = pneg %p602
        $region162: #{tpu_custom_call.1} parent=151 // pred_check_branch
          %2039 = sbr.rel (%p2037) target = $region164
        $region163: #{tpu_custom_call.1} parent=151 // pred_region
          %s2040 = sand.u32 %s59, 1
          %s2041 = scalar_lea.sflag [#allocation19], %s2040
          %s2042 = sand.u32 %s587, 1
          %s2043 = smul.addr %s2042, 8
          %s2044 = scalar_lea.vmem [#allocation20], %s2043
          %2045 = dma.done %s2041, 128
        $region164: #{tpu_custom_call.1} parent=151 // pred_fallthru
          _
        // Predicated region
        $region165: #{tpu_custom_call.1} parent=151 // pred_check
          %p2046 = pneg %p628
        $region166: #{tpu_custom_call.1} parent=151 // pred_check_branch
          %2048 = sbr.rel (%p2046) target = $region168
        $region167: #{tpu_custom_call.1} parent=151 // pred_region
          %s2049 = sand.u32 %s59, 1
          %s2050 = scalar_lea.sflag [#allocation22], %s2049
          %s2051 = sand.u32 %s613, 1
          %s2052 = smul.addr %s2051, 8
          %s2053 = scalar_lea.vmem [#allocation21], %s2052
          %2054 = dma.done %s2050, 128
        $region168: #{tpu_custom_call.1} parent=151 // pred_fallthru
          _
        // Predicated region
        $region169: #{tpu_custom_call.1} parent=151 // pred_check
          %p2055 = pneg %p654
        $region170: #{tpu_custom_call.1} parent=151 // pred_check_branch
          %2057 = sbr.rel (%p2055) target = $region172
        $region171: #{tpu_custom_call.1} parent=151 // pred_region
          %s2058 = sand.u32 %s59, 1
          %s2059 = scalar_lea.sflag [#allocation22], %s2058
          %s2060 = sand.u32 %s639, 1
          %s2061 = smul.addr %s2060, 8
          %s2062 = scalar_lea.vmem [#allocation23], %s2061
          %2063 = dma.done %s2059, 128
        $region172: #{tpu_custom_call.1} parent=151 // pred_fallthru
          _
      $region152: #{tpu_custom_call.1} parent=5 // pred_fallthru
        _
    $region6: #{tpu_custom_call.1} parent=1 // loop_footer
      %s57 = sadd.s32 1, %s53
    $region7: #{tpu_custom_call.1} parent=1 // loop_footer_branch
      %52 = sbr.rel target = $region3
    $region8: #{tpu_custom_call.1} parent=1 // loop_exit
      _
    %2064 = vsyncpa [#allocation3], 1
    %s2065 = scalar_lea.sflag [#allocation3], 1
    %2066 = vsyncpa %s2065, 1
    %2067 = vsyncpa [#allocation6], 1
    %s2068 = scalar_lea.sflag [#allocation6], 1
    %2069 = vsyncpa %s2068, 1
    %2070 = vsyncpa [#allocation9], 1
    %s2071 = scalar_lea.sflag [#allocation9], 1
    %2072 = vsyncpa %s2071, 1
    %2073 = vsyncpa [#allocation12], 1
    %s2074 = scalar_lea.sflag [#allocation12], 1
    %2075 = vsyncpa %s2074, 1
    %2076 = vsyncpa [#allocation15], 1
    %s2077 = scalar_lea.sflag [#allocation15], 1
    %2078 = vsyncpa %s2077, 1
    %2079 = vsyncpa [#allocation4], 1
    %s2080 = scalar_lea.sflag [#allocation4], 1
    %2081 = vsyncpa %s2080, 1
    %2082 = vsyncpa [#allocation19], 1
    %s2083 = scalar_lea.sflag [#allocation19], 1
    %2084 = vsyncpa %s2083, 1
    %2085 = vsyncpa [#allocation22], 1
    %s2086 = scalar_lea.sflag [#allocation22], 1
    %2087 = vsyncpa %s2086, 1

</llo_original>
